<compile_context>
chip_gen: v6e
topology: v6e:2x2x1
jax: 0.10.0
libtpu: 0.0.40
codegen_flags: <defaults>
</compile_context>

<pallas_src>
import math
import jax
import jax.numpy as jnp
from jax.experimental import pallas as pl
from jax.experimental.pallas import tpu as pltpu


def mamba_block_kernel(x_ref, rmsw_ref, wx_ref, wres_ref, convw_ref, convb_ref,
                       wout_ref, o_ref, xn_ref, acc_ref, pbuf_ref, halo_ref):
    # Per grid step (b, l, j):
    #   x_ref     (1, TL, d_model)   f32   (same block for every j -> no re-DMA)
    #   rmsw_ref  (1, d_model)       f32
    #   wx_ref    (d_model, TN)      bf16  in_proj x-half, column tile j
    #   wres_ref  (d_model, TN)      bf16  in_proj res-half, column tile j
    #   convw_ref (K, TN)            f32
    #   convb_ref (1, TN)            f32
    #   wout_ref  (TN, d_model)      bf16  out_proj row tile j
    #   o_ref     (1, TL, d_model)   bf16  written only at j == nj-1
    #   xn_ref    (TL, d_model)      bf16  scratch: cached RMSNorm output
    #   acc_ref   (TL, d_model)      f32   scratch: out_proj accumulator over j
    #   pbuf_ref  (HEAD + TL, TN)    f32   scratch: conv staging (halo ++ xp)
    #   halo_ref  (nj, K-1, TN)      f32   scratch: per-channel-tile conv halo
    K = convw_ref.shape[0]
    TL = x_ref.shape[1]
    TN = convw_ref.shape[1]
    head = pbuf_ref.shape[0] - TL

    l_idx = pl.program_id(1)
    j = pl.program_id(2)
    nj = pl.num_programs(2)

    # ---- RMSNorm once per (b, l) tile (f32), cached as bf16 for the MXU ----
    @pl.when(j == 0)
    def _():
        x = x_ref[0]                                           # (TL, d_model)
        ms = jnp.mean(x * x, axis=-1, keepdims=True)           # (TL, 1)
        xn = x * jax.lax.rsqrt(ms + 1e-5) * rmsw_ref[...]
        xn_ref[...] = xn.astype(jnp.bfloat16)

    xn_bf = xn_ref[...]                                        # (TL, d_model) bf16

    # ---- in_proj column tile: two lane-aligned bf16 dots, f32 accumulation ----
    xp = jnp.dot(xn_bf, wx_ref[...], preferred_element_type=jnp.float32)     # (TL, TN)
    res = jnp.dot(xn_bf, wres_ref[...], preferred_element_type=jnp.float32)  # (TL, TN)

    # ---- causal depthwise conv1d (the "ssm") for this channel tile ----
    # y[t, c] = bias[c] + sum_k w[k, c] * xp_global[t - (K-1-k), c]
    w = convw_ref[...]                                         # (K, TN)
    y = convb_ref[...] + w[K - 1:K, :] * xp                    # current tap from registers
    if K > 1:
        # Halo rows: previous sequence tile's last K-1 conv inputs (zeros at l==0).
        @pl.when(l_idx == 0)
        def _():
            pbuf_ref[pl.ds(head - (K - 1), K - 1), :] = jnp.zeros(
                (K - 1, TN), jnp.float32)

        @pl.when(l_idx > 0)
        def _():
            pbuf_ref[pl.ds(head - (K - 1), K - 1), :] = halo_ref[j]

        # Stage this tile's conv input right after the halo rows so every
        # shifted tap is a single contiguous (TL, TN) slice.
        pbuf_ref[pl.ds(head, TL), :] = xp
        for k in range(K - 1):
            y = y + w[k:k + 1, :] * pbuf_ref[pl.ds(head - (K - 1) + k, TL), :]

        # Carry the last K-1 rows of xp (still in registers) to the next seq tile.
        halo_ref[j] = xp[TL - (K - 1):, :]

    # ---- gate: y * silu(res)  (f32) ----
    g = y * (res * jax.nn.sigmoid(res))

    # ---- out_proj: partial product for this channel tile, reduced over j ----
    partial = jnp.dot(g.astype(jnp.bfloat16), wout_ref[...],
                      preferred_element_type=jnp.float32)      # (TL, d_model)

    @pl.when(j == 0)
    def _():
        acc_ref[...] = partial

    @pl.when(j > 0)
    def _():
        acc_ref[...] += partial

    @pl.when(j == nj - 1)
    def _():
        o_ref[0] = acc_ref[...].astype(o_ref.dtype)


def _vmem_limit_bytes():
    """Generation-aware VMEM budget: ~75% of physical, capped at 100 MiB."""
    try:
        cap = int(pltpu.get_tpu_info().vmem_capacity_bytes)
    except Exception:
        cap = 64 * 1024 * 1024            # conservative fallback (v7x per-core)
    return min((cap * 3) // 4, 100 * 1024 * 1024)


def mamba_block(x, rms_w, w_x, w_res, conv_w, conv_b, w_out, *,
                seq_tile=256, ch_tile=512, out_dtype=jnp.bfloat16):
    B, L, d_model = x.shape
    d_inner = w_out.shape[0]
    K = conv_w.shape[0]

    tl = min(seq_tile, L)
    assert L % tl == 0, "seq length must be divisible by the sequence tile"
    nl = L // tl

    tn = min(ch_tile, d_inner)
    assert d_inner % tn == 0, "d_inner must be divisible by the channel tile"
    nj = d_inner // tn

    head = ((K - 1 + 7) // 8) * 8          # sublane-aligned halo region (>= K-1)

    return pl.pallas_call(
        mamba_block_kernel,
        out_shape=jax.ShapeDtypeStruct((B, L, d_model), out_dtype),
        grid_spec=pltpu.PrefetchScalarGridSpec(
            num_scalar_prefetch=0,
            grid=(B, nl, nj),
            in_specs=[
                pl.BlockSpec((1, tl, d_model), lambda b, l, j: (b, l, 0)),   # x tile
                pl.BlockSpec((1, d_model), lambda b, l, j: (0, 0)),          # RMSNorm weight
                pl.BlockSpec((d_model, tn), lambda b, l, j: (0, j)),         # in_proj (x half)
                pl.BlockSpec((d_model, tn), lambda b, l, j: (0, j)),         # in_proj (res half)
                pl.BlockSpec((K, tn), lambda b, l, j: (0, j)),               # conv weight
                pl.BlockSpec((1, tn), lambda b, l, j: (0, j)),               # conv bias
                pl.BlockSpec((tn, d_model), lambda b, l, j: (j, 0)),         # out_proj weight
            ],
            out_specs=pl.BlockSpec((1, tl, d_model), lambda b, l, j: (b, l, 0)),
            scratch_shapes=[
                pltpu.VMEM((tl, d_model), jnp.bfloat16),           # cached RMSNorm output
                pltpu.VMEM((tl, d_model), jnp.float32),            # out_proj accumulator
                pltpu.VMEM((head + tl, tn), jnp.float32),          # conv staging buffer
                pltpu.VMEM((nj, max(K - 1, 1), tn), jnp.float32),  # per-channel-tile halo
            ],
        ),
        compiler_params=pltpu.CompilerParams(
            # Batch tiles are independent (megacore-shardable).  The sequence
            # axis carries the conv halo and the channel axis carries the
            # out_proj accumulation -> both "arbitrary".
            # TODO(synk): for B == 1 prefill on v7x, split the sequence across the
            # two TensorCores and exchange the K-1-row conv halo via CMEM.
            dimension_semantics=("parallel", "arbitrary", "arbitrary"),
            vmem_limit_bytes=_vmem_limit_bytes(),
        ),
    )(x, rms_w, w_x, w_res, conv_w, conv_b, w_out)


def reference(x, rms_w, w_x, w_res, conv_w, conv_b, w_out):
    ms = jnp.mean(x * x, axis=-1, keepdims=True)
    xn = x * jax.lax.rsqrt(ms + 1e-5) * rms_w
    xn_bf = xn.astype(jnp.bfloat16)
    xp = jnp.einsum("bld,de->ble", xn_bf, w_x, preferred_element_type=jnp.float32)
    res = jnp.einsum("bld,de->ble", xn_bf, w_res, preferred_element_type=jnp.float32)
    K = conv_w.shape[0]
    L = xp.shape[1]
    xp_pad = jnp.pad(xp, ((0, 0), (K - 1, 0), (0, 0)))
    y = jnp.zeros_like(xp) + conv_b
    for k in range(K):
        y = y + conv_w[k] * xp_pad[:, k:k + L, :]
    g = y * (res * jax.nn.sigmoid(res))
    return jnp.einsum("ble,ed->bld", g.astype(jnp.bfloat16), w_out,
                      preferred_element_type=jnp.float32)


if __name__ == "__main__":
    # Small but lane-aligned shapes; two sequence tiles AND two channel tiles
    # per batch row exercise both the cross-tile causal-conv carry and the
    # out_proj accumulation over channel tiles.
    B, L, d_model = 2, 256, 128
    expand, d_conv = 2, 3
    d_inner = expand * d_model

    key = jax.random.PRNGKey(0)
    k_x, k_wx, k_wr, k_cw, k_cb, k_out = jax.random.split(key, 6)

    x = jax.random.normal(k_x, (B, L, d_model), dtype=jnp.float32)

    rms_w = jnp.ones((1, d_model), dtype=jnp.float32)
    # in_proj weight split into x/res halves, pre-transposed to (d_model, d_inner),
    # stored in bf16 (native MXU operand dtype); out_proj likewise.
    w_x = (jax.random.normal(k_wx, (d_model, d_inner), dtype=jnp.float32)
           / math.sqrt(d_model)).astype(jnp.bfloat16)
    w_res = (jax.random.normal(k_wr, (d_model, d_inner), dtype=jnp.float32)
             / math.sqrt(d_model)).astype(jnp.bfloat16)
    conv_w = jax.random.normal(k_cw, (d_conv, d_inner), dtype=jnp.float32) / math.sqrt(d_conv)
    conv_b = jax.random.normal(k_cb, (1, d_inner), dtype=jnp.float32) * 0.1
    w_out = (jax.random.normal(k_out, (d_inner, d_model), dtype=jnp.float32)
             / math.sqrt(d_inner)).astype(jnp.bfloat16)

    out = mamba_block(x, rms_w, w_x, w_res, conv_w, conv_b, w_out,
                      seq_tile=128, ch_tile=128)
    out = jax.block_until_ready(out)

    ref = reference(x, rms_w, w_x, w_res, conv_w, conv_b, w_out)
    assert out.shape == (B, L, d_model)
    assert out.dtype == jnp.bfloat16
    assert jnp.allclose(out.astype(jnp.float32), ref, atol=2e-2, rtol=2e-2), \
        "mismatch vs pure-JAX reference"

    print("KERNEL_OK")
</pallas_src>

<mosaic_0001>
module attributes {stable_mosaic.version = 11 : i64} {
  func.func @mamba_block_kernel(%arg0: i32, %arg1: i32, %arg2: i32, %arg3: memref<1x128x128xf32, #tpu.memory_space<vmem>>, %arg4: memref<1x128xf32, #tpu.memory_space<vmem>>, %arg5: memref<128x128xbf16, #tpu.memory_space<vmem>>, %arg6: memref<128x128xbf16, #tpu.memory_space<vmem>>, %arg7: memref<3x128xf32, #tpu.memory_space<vmem>>, %arg8: memref<1x128xf32, #tpu.memory_space<vmem>>, %arg9: memref<128x128xbf16, #tpu.memory_space<vmem>>, %arg10: memref<1x128x128xbf16, #tpu.memory_space<vmem>>, %arg11: memref<128x128xbf16, #tpu.memory_space<vmem>>, %arg12: memref<128x128xf32, #tpu.memory_space<vmem>>, %arg13: memref<136x128xf32, #tpu.memory_space<vmem>>, %arg14: memref<2x2x128xf32, #tpu.memory_space<vmem>>) attributes {dimension_semantics = [#tpu.dimension_semantics<parallel>, #tpu.dimension_semantics<arbitrary>, #tpu.dimension_semantics<arbitrary>], iteration_bounds = array<i64: 2, 2, 2>, scalar_prefetch = 0 : i64, scratch_operands = 4 : i64, tpu.core_type = #tpu.core_type<tc>, window_params = [{transform_indices = @transform_0, window_bounds = array<i64: 1, 128, 128>}, {pipeline_mode = #tpu.pipeline_mode<synchronous>, transform_indices = @transform_1, window_bounds = array<i64: 1, 128>}, {transform_indices = @transform_2, window_bounds = array<i64: 128, 128>}, {transform_indices = @transform_3, window_bounds = array<i64: 128, 128>}, {transform_indices = @transform_4, window_bounds = array<i64: 3, 128>}, {transform_indices = @transform_5, window_bounds = array<i64: 1, 128>}, {transform_indices = @transform_6, window_bounds = array<i64: 128, 128>}, {transform_indices = @transform_7, window_bounds = array<i64: 1, 128, 128>}]} {
    %c0_i32 = arith.constant 0 : i32
    %0 = arith.cmpi eq, %arg2, %c0_i32 : i32
    %1 = arith.extui %0 : i1 to i32
    %c0_i32_0 = arith.constant 0 : i32
    %2 = arith.cmpi ne, %1, %c0_i32_0 : i32
    scf.if %2 {
      %c0_29 = arith.constant 0 : index
      %c0_30 = arith.constant 0 : index
      %c0_31 = arith.constant 0 : index
      %56 = vector.load %arg3[%c0_29, %c0_30, %c0_31] : memref<1x128x128xf32, #tpu.memory_space<vmem>>, vector<1x128x128xf32>
      %57 = vector.shape_cast %56 : vector<1x128x128xf32> to vector<128x128xf32>
      %58 = arith.mulf %57, %57 : vector<128x128xf32>
      %cst_32 = arith.constant dense<0.000000e+00> : vector<128xf32>
      %59 = vector.multi_reduction <add>, %58, %cst_32 [1] : vector<128x128xf32> to vector<128xf32>
      %60 = vector.shape_cast %59 : vector<128xf32> to vector<128x1xf32>
      %cst_33 = arith.constant 1.280000e+02 : f32
      %61 = vector.broadcast %cst_33 : f32 to vector<128x1xf32>
      %62 = arith.divf %60, %61 : vector<128x1xf32>
      %cst_34 = arith.constant 9.99999974E-6 : f32
      %63 = vector.broadcast %cst_34 : f32 to vector<128x1xf32>
      %64 = arith.addf %62, %63 : vector<128x1xf32>
      %65 = math.rsqrt %64 : vector<128x1xf32>
      %66 = vector.broadcast %65 : vector<128x1xf32> to vector<128x128xf32>
      %67 = arith.mulf %57, %66 : vector<128x128xf32>
      %c0_35 = arith.constant 0 : index
      %c0_36 = arith.constant 0 : index
      %68 = vector.load %arg4[%c0_35, %c0_36] : memref<1x128xf32, #tpu.memory_space<vmem>>, vector<1x128xf32>
      %69 = vector.broadcast %68 : vector<1x128xf32> to vector<128x128xf32>
      %70 = arith.mulf %67, %69 : vector<128x128xf32>
      %71 = arith.truncf %70 : vector<128x128xf32> to vector<128x128xbf16>
      %c0_37 = arith.constant 0 : index
      %c0_38 = arith.constant 0 : index
      %72 = vector.load %arg11[%c0_37, %c0_38] : memref<128x128xbf16, #tpu.memory_space<vmem>>, vector<128x128xbf16>
      tpu.vector_store %arg11[%c0_37, %c0_38], %71 {strides = array<i32>} : memref<128x128xbf16, #tpu.memory_space<vmem>>, vector<128x128xbf16>,
    } else {
    }
    %c0 = arith.constant 0 : index
    %c0_1 = arith.constant 0 : index
    %3 = vector.load %arg11[%c0, %c0_1] : memref<128x128xbf16, #tpu.memory_space<vmem>>, vector<128x128xbf16>
    %c0_2 = arith.constant 0 : index
    %c0_3 = arith.constant 0 : index
    %4 = vector.load %arg5[%c0_2, %c0_3] : memref<128x128xbf16, #tpu.memory_space<vmem>>, vector<128x128xbf16>
    %cst = arith.constant dense<0.000000e+00> : vector<128x128xf32>
    %5 = tpu.matmul %3, %4, %cst {dimension_numbers = #tpu.dot_dimension_numbers<[1], [0], [0], [1], [0, 0, 1, 1], [], []>} : vector<128x128xbf16>, vector<128x128xbf16>, vector<128x128xf32> -> vector<128x128xf32>
    %c0_4 = arith.constant 0 : index
    %c0_5 = arith.constant 0 : index
    %6 = vector.load %arg6[%c0_4, %c0_5] : memref<128x128xbf16, #tpu.memory_space<vmem>>, vector<128x128xbf16>
    %cst_6 = arith.constant dense<0.000000e+00> : vector<128x128xf32>
    %7 = tpu.matmul %3, %6, %cst_6 {dimension_numbers = #tpu.dot_dimension_numbers<[1], [0], [0], [1], [0, 0, 1, 1], [], []>} : vector<128x128xbf16>, vector<128x128xbf16>, vector<128x128xf32> -> vector<128x128xf32>
    %c0_7 = arith.constant 0 : index
    %c0_8 = arith.constant 0 : index
    %8 = vector.load %arg7[%c0_7, %c0_8] : memref<3x128xf32, #tpu.memory_space<vmem>>, vector<3x128xf32>
    %c0_9 = arith.constant 0 : index
    %c0_10 = arith.constant 0 : index
    %9 = vector.load %arg8[%c0_9, %c0_10] : memref<1x128xf32, #tpu.memory_space<vmem>>, vector<1x128xf32>
    %10 = vector.extract_strided_slice %8 {offsets = [2, 0], sizes = [1, 128], strides = [1, 1]} : vector<3x128xf32> to vector<1x128xf32>
    %11 = vector.broadcast %10 : vector<1x128xf32> to vector<128x128xf32>
    %12 = arith.mulf %11, %5 : vector<128x128xf32>
    %13 = vector.broadcast %9 : vector<1x128xf32> to vector<128x128xf32>
    %14 = arith.addf %13, %12 : vector<128x128xf32>
    %c0_i32_11 = arith.constant 0 : i32
    %15 = arith.cmpi eq, %arg1, %c0_i32_11 : i32
    %16 = arith.extui %15 : i1 to i32
    %c0_i32_12 = arith.constant 0 : i32
    %17 = arith.cmpi ne, %16, %c0_i32_12 : i32
    scf.if %17 {
      %cst_29 = arith.constant 0.000000e+00 : f32
      %56 = vector.broadcast %cst_29 : f32 to vector<2x128xf32>
      %c6_30 = arith.constant 6 : index
      %c0_31 = arith.constant 0 : index
      %57 = vector.load %arg13[%c6_30, %c0_31] : memref<136x128xf32, #tpu.memory_space<vmem>>, vector<2x128xf32>
      tpu.vector_store %arg13[%c6_30, %c0_31], %56 {strides = array<i32>} : memref<136x128xf32, #tpu.memory_space<vmem>>, vector<2x128xf32>,
    } else {
    }
    %c0_i32_13 = arith.constant 0 : i32
    %18 = arith.cmpi sgt, %arg1, %c0_i32_13 : i32
    %19 = arith.extui %18 : i1 to i32
    %c0_i32_14 = arith.constant 0 : i32
    %20 = arith.cmpi ne, %19, %c0_i32_14 : i32
    scf.if %20 {
      %56 = arith.index_cast %arg2 : i32 to index
      %c0_29 = arith.constant 0 : index
      %c0_30 = arith.constant 0 : index
      %57 = vector.load %arg14[%56, %c0_29, %c0_30] : memref<2x2x128xf32, #tpu.memory_space<vmem>>, vector<1x2x128xf32>
      %58 = vector.shape_cast %57 : vector<1x2x128xf32> to vector<2x128xf32>
      %c6_31 = arith.constant 6 : index
      %c0_32 = arith.constant 0 : index
      %59 = vector.load %arg13[%c6_31, %c0_32] : memref<136x128xf32, #tpu.memory_space<vmem>>, vector<2x128xf32>
      tpu.vector_store %arg13[%c6_31, %c0_32], %58 {strides = array<i32>} : memref<136x128xf32, #tpu.memory_space<vmem>>, vector<2x128xf32>,
    } else {
    }
    %c8 = arith.constant 8 : index
    %c0_15 = arith.constant 0 : index
    %21 = vector.load %arg13[%c8, %c0_15] : memref<136x128xf32, #tpu.memory_space<vmem>>, vector<128x128xf32>
    tpu.vector_store %arg13[%c8, %c0_15], %5 {strides = array<i32>} : memref<136x128xf32, #tpu.memory_space<vmem>>, vector<128x128xf32>,
    %22 = vector.extract_strided_slice %8 {offsets = [0, 0], sizes = [1, 128], strides = [1, 1]} : vector<3x128xf32> to vector<1x128xf32>
    %c6 = arith.constant 6 : index
    %c0_16 = arith.constant 0 : index
    %23 = vector.load %arg13[%c6, %c0_16] : memref<136x128xf32, #tpu.memory_space<vmem>>, vector<128x128xf32>
    %24 = vector.broadcast %22 : vector<1x128xf32> to vector<128x128xf32>
    %25 = arith.mulf %24, %23 : vector<128x128xf32>
    %26 = arith.addf %14, %25 : vector<128x128xf32>
    %27 = vector.extract_strided_slice %8 {offsets = [1, 0], sizes = [1, 128], strides = [1, 1]} : vector<3x128xf32> to vector<1x128xf32>
    %c7 = arith.constant 7 : index
    %c0_17 = arith.constant 0 : index
    %28 = vector.load %arg13[%c7, %c0_17] : memref<136x128xf32, #tpu.memory_space<vmem>>, vector<128x128xf32>
    %29 = vector.broadcast %27 : vector<1x128xf32> to vector<128x128xf32>
    %30 = arith.mulf %29, %28 : vector<128x128xf32>
    %31 = arith.addf %26, %30 : vector<128x128xf32>
    %32 = vector.extract_strided_slice %5 {offsets = [126, 0], sizes = [2, 128], strides = [1, 1]} : vector<128x128xf32> to vector<2x128xf32>
    %33 = arith.index_cast %arg2 : i32 to index
    %c0_18 = arith.constant 0 : index
    %c0_19 = arith.constant 0 : index
    %34 = vector.load %arg14[%33, %c0_18, %c0_19] : memref<2x2x128xf32, #tpu.memory_space<vmem>>, vector<1x2x128xf32>
    %35 = vector.shape_cast %34 : vector<1x2x128xf32> to vector<2x128xf32>
    %36 = vector.shape_cast %32 : vector<2x128xf32> to vector<1x2x128xf32>
    tpu.vector_store %arg14[%33, %c0_18, %c0_19], %36 {strides = array<i32>} : memref<2x2x128xf32, #tpu.memory_space<vmem>>, vector<1x2x128xf32>,
    %37 = arith.negf %7 : vector<128x128xf32>
    %38 = math.exp %37 : vector<128x128xf32>
    %cst_20 = arith.constant 1.000000e+00 : f32
    %39 = vector.broadcast %cst_20 : f32 to vector<128x128xf32>
    %40 = arith.addf %39, %38 : vector<128x128xf32>
    %41 = arith.divf %39, %40 : vector<128x128xf32>
    %42 = arith.mulf %7, %41 : vector<128x128xf32>
    %43 = arith.mulf %31, %42 : vector<128x128xf32>
    %44 = arith.truncf %43 : vector<128x128xf32> to vector<128x128xbf16>
    %c0_21 = arith.constant 0 : index
    %c0_22 = arith.constant 0 : index
    %45 = vector.load %arg9[%c0_21, %c0_22] : memref<128x128xbf16, #tpu.memory_space<vmem>>, vector<128x128xbf16>
    %cst_23 = arith.constant dense<0.000000e+00> : vector<128x128xf32>
    %46 = tpu.matmul %44, %45, %cst_23 {dimension_numbers = #tpu.dot_dimension_numbers<[1], [0], [0], [1], [0, 0, 1, 1], [], []>} : vector<128x128xbf16>, vector<128x128xbf16>, vector<128x128xf32> -> vector<128x128xf32>
    %c0_i32_24 = arith.constant 0 : i32
    %47 = arith.cmpi eq, %arg2, %c0_i32_24 : i32
    %48 = arith.extui %47 : i1 to i32
    %c0_i32_25 = arith.constant 0 : i32
    %49 = arith.cmpi ne, %48, %c0_i32_25 : i32
    scf.if %49 {
      %c0_29 = arith.constant 0 : index
      %c0_30 = arith.constant 0 : index
      %56 = vector.load %arg12[%c0_29, %c0_30] : memref<128x128xf32, #tpu.memory_space<vmem>>, vector<128x128xf32>
      tpu.vector_store %arg12[%c0_29, %c0_30], %46 {strides = array<i32>} : memref<128x128xf32, #tpu.memory_space<vmem>>, vector<128x128xf32>,
    } else {
    }
    %c0_i32_26 = arith.constant 0 : i32
    %50 = arith.cmpi sgt, %arg2, %c0_i32_26 : i32
    %51 = arith.extui %50 : i1 to i32
    %c0_i32_27 = arith.constant 0 : i32
    %52 = arith.cmpi ne, %51, %c0_i32_27 : i32
    scf.if %52 {
      %c0_29 = arith.constant 0 : index
      %c0_30 = arith.constant 0 : index
      %56 = vector.load %arg12[%c0_29, %c0_30] : memref<128x128xf32, #tpu.memory_space<vmem>>, vector<128x128xf32>
      %57 = arith.addf %56, %46 : vector<128x128xf32>
      %c0_31 = arith.constant 0 : index
      %c0_32 = arith.constant 0 : index
      %58 = vector.load %arg12[%c0_31, %c0_32] : memref<128x128xf32, #tpu.memory_space<vmem>>, vector<128x128xf32>
      tpu.vector_store %arg12[%c0_31, %c0_32], %57 {strides = array<i32>} : memref<128x128xf32, #tpu.memory_space<vmem>>, vector<128x128xf32>,
    } else {
    }
    %c1_i32 = arith.constant 1 : i32
    %53 = arith.cmpi eq, %arg2, %c1_i32 : i32
    %54 = arith.extui %53 : i1 to i32
    %c0_i32_28 = arith.constant 0 : i32
    %55 = arith.cmpi ne, %54, %c0_i32_28 : i32
    scf.if %55 {
      %c0_29 = arith.constant 0 : index
      %c0_30 = arith.constant 0 : index
      %56 = vector.load %arg12[%c0_29, %c0_30] : memref<128x128xf32, #tpu.memory_space<vmem>>, vector<128x128xf32>
      %57 = arith.truncf %56 : vector<128x128xf32> to vector<128x128xbf16>
      %c0_31 = arith.constant 0 : index
      %c0_32 = arith.constant 0 : index
      %c0_33 = arith.constant 0 : index
      %58 = vector.load %arg10[%c0_31, %c0_32, %c0_33] : memref<1x128x128xbf16, #tpu.memory_space<vmem>>, vector<1x128x128xbf16>
      %59 = vector.shape_cast %58 : vector<1x128x128xbf16> to vector<128x128xbf16>
      %60 = vector.shape_cast %57 : vector<128x128xbf16> to vector<1x128x128xbf16>
      tpu.vector_store %arg10[%c0_31, %c0_32, %c0_33], %60 {strides = array<i32>} : memref<1x128x128xbf16, #tpu.memory_space<vmem>>, vector<1x128x128xbf16>,
    } else {
    }
    return
  }
  func.func @transform_0(%arg0: i32, %arg1: i32, %arg2: i32) -> (i32, i32, i32) {
    %c0_i32 = arith.constant 0 : i32
    %c0_i32_0 = arith.constant 0 : i32
    return %arg0, %arg1, %c0_i32 : i32, i32, i32
  }
  func.func @transform_1(%arg0: i32, %arg1: i32, %arg2: i32) -> (i32, i32) {
    %c0_i32 = arith.constant 0 : i32
    %c0_i32_0 = arith.constant 0 : i32
    %c0_i32_1 = arith.constant 0 : i32
    return %c0_i32, %c0_i32_0 : i32, i32
  }
  func.func @transform_2(%arg0: i32, %arg1: i32, %arg2: i32) -> (i32, i32) {
    %c0_i32 = arith.constant 0 : i32
    %c0_i32_0 = arith.constant 0 : i32
    return %c0_i32, %arg2 : i32, i32
  }
  func.func @transform_3(%arg0: i32, %arg1: i32, %arg2: i32) -> (i32, i32) {
    %c0_i32 = arith.constant 0 : i32
    %c0_i32_0 = arith.constant 0 : i32
    return %c0_i32, %arg2 : i32, i32
  }
  func.func @transform_4(%arg0: i32, %arg1: i32, %arg2: i32) -> (i32, i32) {
    %c0_i32 = arith.constant 0 : i32
    %c0_i32_0 = arith.constant 0 : i32
    return %c0_i32, %arg2 : i32, i32
  }
  func.func @transform_5(%arg0: i32, %arg1: i32, %arg2: i32) -> (i32, i32) {
    %c0_i32 = arith.constant 0 : i32
    %c0_i32_0 = arith.constant 0 : i32
    return %c0_i32, %arg2 : i32, i32
  }
  func.func @transform_6(%arg0: i32, %arg1: i32, %arg2: i32) -> (i32, i32) {
    %c0_i32 = arith.constant 0 : i32
    %c0_i32_0 = arith.constant 0 : i32
    return %arg2, %c0_i32 : i32, i32
  }
  func.func @transform_7(%arg0: i32, %arg1: i32, %arg2: i32) -> (i32, i32, i32) {
    %c0_i32 = arith.constant 0 : i32
    %c0_i32_0 = arith.constant 0 : i32
    return %arg0, %arg1, %c0_i32 : i32, i32, i32
  }
}

</mosaic_0001>

<llo_original>
// kernel: tpu_custom_call.1
$region0: #{tpu_custom_call.1}
  #allocation0 [shape = 'u32[]', space=smem, size = 0x4, offset = 0x4, fixed_abs, tag = 'smem constant byte address 0x4 - core index']
  #allocation1 [shape = 'u32[144,128]{1,0:T(1,128)}', space=vmem, size = 0x12000, scoped, tag = 'internal scratch']
  #allocation2 [shape = 'bf16[128,128]{1,0:T(8,128)(2,1)}', space=vmem, size = 0x8000, scoped, tag = 'scratch operand']
  #allocation3 [shape = 'f32[128,128]{1,0:T(8,128)}', space=vmem, size = 0x10000, scoped, tag = 'scratch operand']
  #allocation4 [shape = 'f32[136,128]{1,0:T(8,128)}', space=vmem, size = 0x11000, scoped, tag = 'scratch operand']
  #allocation5 [shape = 'f32[2,2,128]{2,1,0:T(2,128)}', space=vmem, size = 0x800, scoped, tag = 'scratch operand']
  %s0 = inlined_call_operand.hbm [shape: f32[2,256,128], index: 0, kind: input, shape index: {}]
  %s1 = inlined_call_operand.vmem [shape: f32[1,128], index: 1, kind: input, shape index: {}]
  %s2 = inlined_call_operand.hbm [shape: bf16[128,256], index: 2, kind: input, shape index: {}]
  %s3 = inlined_call_operand.hbm [shape: bf16[128,256], index: 3, kind: input, shape index: {}]
  %s4 = inlined_call_operand.hbm [shape: f32[3,256], index: 4, kind: input, shape index: {}]
  %s5 = inlined_call_operand.vmem [shape: f32[1,256], index: 5, kind: input, shape index: {}]
  %s6 = inlined_call_operand.hbm [shape: bf16[256,128], index: 6, kind: input, shape index: {}]
  %s7 = inlined_call_operand.hbm [shape: bf16[2,256,128], index: 7, kind: output, shape index: {}]
  %s8 = sld [smem:[#allocation0]]
  $region105: #{tpu_custom_call.1} parent=0
    _
  %s10 = ssub.s32 1, %s8
  %s11 = scalar_select 0, %s10, %s8
  $region1: #{tpu_custom_call.1} parent=0
    #allocation6 [shape = 'u8[131072]{0}', space=vmem, size = 0x20000, scoped, tag = 'input window, operand 0']
    #allocation7 [shape = 's32[2]{0}', space=sflag, size = 0x8, scoped, tag = 'scoped memory for tpu_custom_call.1']
    #allocation8 [shape = 's32[2]{0}', space=sflag, size = 0x8, scoped, tag = 'scoped memory for tpu_custom_call.1']
    #allocation9 [shape = 'u8[65536]{0}', space=vmem, size = 0x10000, scoped, tag = 'input window, operand 2']
    #allocation10 [shape = 's32[2]{0}', space=sflag, size = 0x8, scoped, tag = 'scoped memory for tpu_custom_call.1']
    #allocation11 [shape = 'u8[65536]{0}', space=vmem, size = 0x10000, scoped, tag = 'input window, operand 3']
    #allocation12 [shape = 'u8[4096]{0}', space=vmem, size = 0x1000, scoped, tag = 'input window, operand 4']
    #allocation13 [shape = 's32[2]{0}', space=sflag, size = 0x8, scoped, tag = 'scoped memory for tpu_custom_call.1']
    #allocation14 [shape = 'u8[65536]{0}', space=vmem, size = 0x10000, scoped, tag = 'input window, operand 6']
    #allocation15 [shape = 'u8[65536]{0}', space=vmem, size = 0x10000, scoped, tag = 'output window, operand 0']
    %12 = vsyncpa [#allocation7], 0
    %s13 = scalar_lea.sflag [#allocation7], 1
    %14 = vsyncpa %s13, 0
    %15 = vsyncpa [#allocation10], 0
    %s16 = scalar_lea.sflag [#allocation10], 1
    %17 = vsyncpa %s16, 0
    %18 = vsyncpa [#allocation13], 0
    %s19 = scalar_lea.sflag [#allocation13], 1
    %20 = vsyncpa %s19, 0
    %21 = vsyncpa [#allocation8], 0
    %s22 = scalar_lea.sflag [#allocation8], 1
    %23 = vsyncpa %s22, 0
    loop: start=0, step=1, limit=10
    $region2: #{tpu_custom_call.1} parent=1 // loop_pre_header
      _
    $region3: #{tpu_custom_call.1} parent=1 // loop_header
      %s25 = sphi 0, %s29
      %p26 = scmp.ge.s32.totalorder %s25, 10
      %s32 = sphi 0, %s51
      %s33 = sphi 0, %s47
      %s34 = sphi 0, %s43
      %s35 = sphi 0, %s32
      %s36 = sphi 0, %s33
      %s37 = sphi 0, %s34
      %s38 = sphi 0, %s35
      %s39 = sphi 0, %s36
      %s40 = sphi 0, %s37
      %s56 = sphi 0, %s58
      %s59 = sphi 0, %s56
      %s60 = sphi 0, %s59
      %s76 = sphi 0, %s60
      %s80 = sphi 0, %s80
      %s82 = sphi 0, %s80
      %s83 = sphi 0, %s82
      %s97 = sphi 0, %s83
      %s103 = sphi 0, %s105
      %s106 = sphi 0, %s103
      %s107 = sphi 0, %s106
      %s123 = sphi 0, %s107
      %s129 = sphi 0, %s131
      %s132 = sphi 0, %s129
      %s133 = sphi 0, %s132
      %s149 = sphi 0, %s133
      %s155 = sphi 0, %s157
      %s158 = sphi 0, %s155
      %s159 = sphi 0, %s158
      %s175 = sphi 0, %s159
      %s181 = sphi 0, %s183
      %s184 = sphi 0, %s181
      %s185 = sphi 0, %s184
      %s201 = sphi 0, %s185
      %s207 = sphi 0, %s209
      %s210 = sphi 0, %s207
      %s211 = sphi 0, %s210
      %s227 = sphi 0, %s211
      %s235 = sphi 0, %s237
      %s238 = sphi 0, %s235
      %s239 = sphi 0, %s238
      %s255 = sphi 0, %s239
    $region4: #{tpu_custom_call.1} parent=1 // loop_header_branch
      %28 = sbr.rel (%p26) target = $region8
    $region5: #{tpu_custom_call.1} parent=1 // loop_body
      %s30 = ssub.s32 %s25, 1
      %s31 = ssub.s32 %s25, 2
      %s41 = sadd.s32 1, %s34
      %p42 = scmp.ge.s32.totalorder %s41, 2
      %s43 = scalar_select %p42, 0, %s41
      %s44 = sadd.s32 1, %s33
      %s45 = scalar_select %p42, %s44, %s33
      %p46 = scmp.ge.s32.totalorder %s45, 2
      %s47 = scalar_select %p46, 0, %s45
      %s48 = sadd.s32 1, %s32
      %s49 = scalar_select %p46, %s48, %s32
      %p50 = scmp.ge.s32.totalorder %s49, 2
      %s51 = scalar_select %p50, 0, %s49
      %s52 = ssub.s32 %s32, %s51
      %s53 = ssub.s32 %s33, %s47
      %s54 = sor.u32 %s52, %s53
      %p55 = scmp.eq.s32.totalorder %s54, 0
      %s57 = sadd.s32 %s56, 1
      %s58 = scalar_select %p55, %s56, %s57
      %p61 = pneg %p55
      %p62 = scmp.eq.s32.totalorder %s25, 7
      %p63 = por %p61, %p62
      %p64 = scmp.ne.s32.totalorder %s56, %s59
      %p65 = scmp.eq.s32.totalorder %s25, 0
      %p66 = por %p64, %p65
      %p67 = scmp.ne.s32.totalorder %s56, %s59
      %p68 = scmp.eq.s32.totalorder %s30, 7
      %p69 = por %p67, %p68
      %p70 = scmp.ne.s32.totalorder %s59, %s60
      %p71 = scmp.eq.s32.totalorder %s30, 0
      %p72 = por %p70, %p71
      %p73 = scmp.ne.s32.totalorder %s59, %s60
      %p74 = scmp.eq.s32.totalorder %s31, 7
      %p75 = por %p73, %p74
      %p77 = scmp.ne.s32.totalorder %s60, %s76
      %p78 = scmp.eq.s32.totalorder %s31, 0
      %p79 = por %p77, %p78
      %s81 = sadd.s32 %s80, 1
      %p84 = scmp.eq.s32.totalorder %s25, 7
      %p85 = scmp.ne.s32.totalorder %s80, %s82
      %p86 = scmp.eq.s32.totalorder %s25, 0
      %p87 = por %p85, %p86
      %p88 = scmp.ne.s32.totalorder %s80, %s82
      %p89 = scmp.eq.s32.totalorder %s30, 7
      %p90 = por %p88, %p89
      %p91 = scmp.ne.s32.totalorder %s82, %s83
      %p92 = scmp.eq.s32.totalorder %s30, 0
      %p93 = por %p91, %p92
      %p94 = scmp.ne.s32.totalorder %s82, %s83
      %p95 = scmp.eq.s32.totalorder %s31, 7
      %p96 = por %p94, %p95
      %p98 = scmp.ne.s32.totalorder %s83, %s97
      %p99 = scmp.eq.s32.totalorder %s31, 0
      %p100 = por %p98, %p99
      %s101 = ssub.s32 %s34, %s43
      %p102 = scmp.eq.s32.totalorder %s101, 0
      %s104 = sadd.s32 %s103, 1
      %s105 = scalar_select %p102, %s103, %s104
      %p108 = pneg %p102
      %p109 = scmp.eq.s32.totalorder %s25, 7
      %p110 = por %p108, %p109
      %p111 = scmp.ne.s32.totalorder %s103, %s106
      %p112 = scmp.eq.s32.totalorder %s25, 0
      %p113 = por %p111, %p112
      %p114 = scmp.ne.s32.totalorder %s103, %s106
      %p115 = scmp.eq.s32.totalorder %s30, 7
      %p116 = por %p114, %p115
      %p117 = scmp.ne.s32.totalorder %s106, %s107
      %p118 = scmp.eq.s32.totalorder %s30, 0
      %p119 = por %p117, %p118
      %p120 = scmp.ne.s32.totalorder %s106, %s107
      %p121 = scmp.eq.s32.totalorder %s31, 7
      %p122 = por %p120, %p121
      %p124 = scmp.ne.s32.totalorder %s107, %s123
      %p125 = scmp.eq.s32.totalorder %s31, 0
      %p126 = por %p124, %p125
      %s127 = ssub.s32 %s34, %s43
      %p128 = scmp.eq.s32.totalorder %s127, 0
      %s130 = sadd.s32 %s129, 1
      %s131 = scalar_select %p128, %s129, %s130
      %p134 = pneg %p128
      %p135 = scmp.eq.s32.totalorder %s25, 7
      %p136 = por %p134, %p135
      %p137 = scmp.ne.s32.totalorder %s129, %s132
      %p138 = scmp.eq.s32.totalorder %s25, 0
      %p139 = por %p137, %p138
      %p140 = scmp.ne.s32.totalorder %s129, %s132
      %p141 = scmp.eq.s32.totalorder %s30, 7
      %p142 = por %p140, %p141
      %p143 = scmp.ne.s32.totalorder %s132, %s133
      %p144 = scmp.eq.s32.totalorder %s30, 0
      %p145 = por %p143, %p144
      %p146 = scmp.ne.s32.totalorder %s132, %s133
      %p147 = scmp.eq.s32.totalorder %s31, 7
      %p148 = por %p146, %p147
      %p150 = scmp.ne.s32.totalorder %s133, %s149
      %p151 = scmp.eq.s32.totalorder %s31, 0
      %p152 = por %p150, %p151
      %s153 = ssub.s32 %s34, %s43
      %p154 = scmp.eq.s32.totalorder %s153, 0
      %s156 = sadd.s32 %s155, 1
      %s157 = scalar_select %p154, %s155, %s156
      %p160 = pneg %p154
      %p161 = scmp.eq.s32.totalorder %s25, 7
      %p162 = por %p160, %p161
      %p163 = scmp.ne.s32.totalorder %s155, %s158
      %p164 = scmp.eq.s32.totalorder %s25, 0
      %p165 = por %p163, %p164
      %p166 = scmp.ne.s32.totalorder %s155, %s158
      %p167 = scmp.eq.s32.totalorder %s30, 7
      %p168 = por %p166, %p167
      %p169 = scmp.ne.s32.totalorder %s158, %s159
      %p170 = scmp.eq.s32.totalorder %s30, 0
      %p171 = por %p169, %p170
      %p172 = scmp.ne.s32.totalorder %s158, %s159
      %p173 = scmp.eq.s32.totalorder %s31, 7
      %p174 = por %p172, %p173
      %p176 = scmp.ne.s32.totalorder %s159, %s175
      %p177 = scmp.eq.s32.totalorder %s31, 0
      %p178 = por %p176, %p177
      %s179 = ssub.s32 %s34, %s43
      %p180 = scmp.eq.s32.totalorder %s179, 0
      %s182 = sadd.s32 %s181, 1
      %s183 = scalar_select %p180, %s181, %s182
      %p186 = pneg %p180
      %p187 = scmp.eq.s32.totalorder %s25, 7
      %p188 = por %p186, %p187
      %p189 = scmp.ne.s32.totalorder %s181, %s184
      %p190 = scmp.eq.s32.totalorder %s25, 0
      %p191 = por %p189, %p190
      %p192 = scmp.ne.s32.totalorder %s181, %s184
      %p193 = scmp.eq.s32.totalorder %s30, 7
      %p194 = por %p192, %p193
      %p195 = scmp.ne.s32.totalorder %s184, %s185
      %p196 = scmp.eq.s32.totalorder %s30, 0
      %p197 = por %p195, %p196
      %p198 = scmp.ne.s32.totalorder %s184, %s185
      %p199 = scmp.eq.s32.totalorder %s31, 7
      %p200 = por %p198, %p199
      %p202 = scmp.ne.s32.totalorder %s185, %s201
      %p203 = scmp.eq.s32.totalorder %s31, 0
      %p204 = por %p202, %p203
      %s205 = ssub.s32 %s34, %s43
      %p206 = scmp.eq.s32.totalorder %s205, 0
      %s208 = sadd.s32 %s207, 1
      %s209 = scalar_select %p206, %s207, %s208
      %p212 = pneg %p206
      %p213 = scmp.eq.s32.totalorder %s25, 7
      %p214 = por %p212, %p213
      %p215 = scmp.ne.s32.totalorder %s207, %s210
      %p216 = scmp.eq.s32.totalorder %s25, 0
      %p217 = por %p215, %p216
      %p218 = scmp.ne.s32.totalorder %s207, %s210
      %p219 = scmp.eq.s32.totalorder %s30, 7
      %p220 = por %p218, %p219
      %p221 = scmp.ne.s32.totalorder %s210, %s211
      %p222 = scmp.eq.s32.totalorder %s30, 0
      %p223 = por %p221, %p222
      %p224 = scmp.ne.s32.totalorder %s210, %s211
      %p225 = scmp.eq.s32.totalorder %s31, 7
      %p226 = por %p224, %p225
      %p228 = scmp.ne.s32.totalorder %s211, %s227
      %p229 = scmp.eq.s32.totalorder %s31, 0
      %p230 = por %p228, %p229
      %s231 = ssub.s32 %s32, %s51
      %s232 = ssub.s32 %s33, %s47
      %s233 = sor.u32 %s231, %s232
      %p234 = scmp.eq.s32.totalorder %s233, 0
      %s236 = sadd.s32 %s235, 1
      %s237 = scalar_select %p234, %s235, %s236
      %p240 = pneg %p234
      %p241 = scmp.eq.s32.totalorder %s25, 7
      %p242 = por %p240, %p241
      %p243 = scmp.ne.s32.totalorder %s235, %s238
      %p244 = scmp.eq.s32.totalorder %s25, 0
      %p245 = por %p243, %p244
      %p246 = scmp.ne.s32.totalorder %s235, %s238
      %p247 = scmp.eq.s32.totalorder %s30, 7
      %p248 = por %p246, %p247
      %p249 = scmp.ne.s32.totalorder %s238, %s239
      %p250 = scmp.eq.s32.totalorder %s30, 0
      %p251 = por %p249, %p250
      %p252 = scmp.ne.s32.totalorder %s238, %s239
      %p253 = scmp.eq.s32.totalorder %s31, 7
      %p254 = por %p252, %p253
      %p256 = scmp.ne.s32.totalorder %s239, %s255
      %p257 = scmp.eq.s32.totalorder %s31, 0
      %p258 = por %p256, %p257
      %p259 = scmp.le.s32.totalorder 1, %s25
      %p260 = scmp.lt.s32.totalorder %s25, 9
      %p261 = pnand %p259, %p260
      %p262 = pneg %p261
      // Predicated region
      $region9: #{tpu_custom_call.1} parent=5 // pred_check
        _
      $region10: #{tpu_custom_call.1} parent=5 // pred_check_branch
        %264 = sbr.rel (%p261) target = $region12
      $region11: #{tpu_custom_call.1} parent=5 // pred_region
        %s265 = ssub.s32 %s25, 1
        // Predicated region
        $region13: #{tpu_custom_call.1} parent=11 // pred_check
          %p266 = pneg %p93
        $region14: #{tpu_custom_call.1} parent=11 // pred_check_branch
          %268 = sbr.rel (%p266) target = $region16
        $region15: #{tpu_custom_call.1} parent=11 // pred_region
          _
        $region16: #{tpu_custom_call.1} parent=11 // pred_fallthru
          _
      $region12: #{tpu_custom_call.1} parent=5 // pred_fallthru
        _
      %p269 = scmp.lt.s32.totalorder %s25, 8
      // Predicated region
      $region17: #{tpu_custom_call.1} parent=5 // pred_check
        %p270 = pneg %p269
      $region18: #{tpu_custom_call.1} parent=5 // pred_check_branch
        %272 = sbr.rel (%p270) target = $region20
      $region19: #{tpu_custom_call.1} parent=5 // pred_region
        // Predicated region
        $region21: #{tpu_custom_call.1} parent=19 // pred_check
          %p273 = pneg %p66
        $region22: #{tpu_custom_call.1} parent=19 // pred_check_branch
          %275 = sbr.rel (%p273) target = $region24
        $region23: #{tpu_custom_call.1} parent=19 // pred_region
          %s276 = sand.u32 %s56, 1
          %s277 = scalar_lea.sflag [#allocation7], %s276
          %s278 = sand.u32 %s56, 1
          %s279 = smul.addr %s278, 128
          %s280 = scalar_lea.vmem [#allocation6], %s279
          %s281 = smul.u32 16, %s33
          %s283 = ssub.s32 2048, 2048
          %284 = vsyncadd %s277, %s283
          %s285 = smul.addr %s32, 32
          %s286 = sadd.s32 %s281, %s285
          %s287 = smul.addr %s286, 128
          %s288 = scalar_lea.hbm %s0, %s287
          %s289 = sshll.u32 %s280, 4
          %s290 = int_to_ptr.vmem [resolvable:$true] %s289
          %295 = dma.hbm_to_vmem [thread:$0]  %s288, 2048, %s290, %s277, 128, 128, 8
        $region24: #{tpu_custom_call.1} parent=19 // pred_fallthru
          _
        // Predicated region
        $region25: #{tpu_custom_call.1} parent=19 // pred_check
          %p296 = pneg %p113
        $region26: #{tpu_custom_call.1} parent=19 // pred_check_branch
          %298 = sbr.rel (%p296) target = $region28
        $region27: #{tpu_custom_call.1} parent=19 // pred_region
          %s299 = sand.u32 %s25, 1
          %s300 = scalar_lea.sflag [#allocation10], %s299
          %s301 = sand.u32 %s103, 1
          %s302 = smul.addr %s301, 64
          %s303 = scalar_lea.vmem [#allocation9], %s302
          %s305 = ssub.s32 1024, 1024
          %306 = vsyncadd %s300, %s305
          %s307 = smul.addr %s34, 64
          %s308 = scalar_lea.hbm %s2, %s307
          %s309 = sshll.u32 %s303, 4
          %s310 = int_to_ptr.vmem [resolvable:$true] %s309
          %315 = dma.hbm_to_vmem [thread:$0]  %s308, 1024, %s310, %s300, 128, 64, 4
        $region28: #{tpu_custom_call.1} parent=19 // pred_fallthru
          _
        // Predicated region
        $region29: #{tpu_custom_call.1} parent=19 // pred_check
          %p316 = pneg %p139
        $region30: #{tpu_custom_call.1} parent=19 // pred_check_branch
          %318 = sbr.rel (%p316) target = $region32
        $region31: #{tpu_custom_call.1} parent=19 // pred_region
          %s319 = sand.u32 %s25, 1
          %s320 = scalar_lea.sflag [#allocation10], %s319
          %s321 = sand.u32 %s129, 1
          %s322 = smul.addr %s321, 64
          %s323 = scalar_lea.vmem [#allocation11], %s322
          %s325 = ssub.s32 1024, 1024
          %326 = vsyncadd %s320, %s325
          %s327 = smul.addr %s34, 64
          %s328 = scalar_lea.hbm %s3, %s327
          %s329 = sshll.u32 %s323, 4
          %s330 = int_to_ptr.vmem [resolvable:$true] %s329
          %335 = dma.hbm_to_vmem [thread:$0]  %s328, 1024, %s330, %s320, 128, 64, 4
        $region32: #{tpu_custom_call.1} parent=19 // pred_fallthru
          _
        // Predicated region
        $region33: #{tpu_custom_call.1} parent=19 // pred_check
          %p336 = pneg %p165
        $region34: #{tpu_custom_call.1} parent=19 // pred_check_branch
          %338 = sbr.rel (%p336) target = $region36
        $region35: #{tpu_custom_call.1} parent=19 // pred_region
          %s339 = sand.u32 %s25, 1
          %s340 = scalar_lea.sflag [#allocation13], %s339
          %s341 = sand.u32 %s155, 1
          %s342 = smul.addr %s341, 4
          %s343 = scalar_lea.vmem [#allocation12], %s342
          %s345 = ssub.s32 64, 64
          %346 = vsyncadd %s340, %s345
          %s347 = smul.addr %s34, 64
          %s348 = scalar_lea.hbm %s4, %s347
          %s350 = sshll.u32 %s343, 4
          %s351 = int_to_ptr.vmem [resolvable:$true] %s350
          %353 = dma.hbm_to_vmem [thread:$0]  %s348, 64, %s351, %s340
        $region36: #{tpu_custom_call.1} parent=19 // pred_fallthru
          _
        // Predicated region
        $region37: #{tpu_custom_call.1} parent=19 // pred_check
          %p354 = pneg %p191
        $region38: #{tpu_custom_call.1} parent=19 // pred_check_branch
          %356 = sbr.rel (%p354) target = $region40
        $region39: #{tpu_custom_call.1} parent=19 // pred_region
          %p357 = scmp.lt.s32.totalorder %s34, 1
          %s358 = scalar_select %p357, %s34, 1
          %s359 = scalar_lea.vmem %s5, %s358
        $region40: #{tpu_custom_call.1} parent=19 // pred_fallthru
          _
        // Predicated region
        $region41: #{tpu_custom_call.1} parent=19 // pred_check
          %p360 = pneg %p217
        $region42: #{tpu_custom_call.1} parent=19 // pred_check_branch
          %362 = sbr.rel (%p360) target = $region44
        $region43: #{tpu_custom_call.1} parent=19 // pred_region
          %s363 = sand.u32 %s25, 1
          %s364 = scalar_lea.sflag [#allocation13], %s363
          %s365 = sand.u32 %s207, 1
          %s366 = smul.addr %s365, 64
          %s367 = scalar_lea.vmem [#allocation14], %s366
          %s368 = smul.u32 16, %s34
          %s370 = ssub.s32 1024, 1024
          %371 = vsyncadd %s364, %s370
          %s372 = smul.addr %s368, 64
          %s373 = scalar_lea.hbm %s6, %s372
          %s374 = sshll.u32 %s367, 4
          %s375 = int_to_ptr.vmem [resolvable:$true] %s374
          %380 = dma.hbm_to_vmem [thread:$0]  %s373, 1024, %s375, %s364, 64, 64, 4
        $region44: #{tpu_custom_call.1} parent=19 // pred_fallthru
          _
      $region20: #{tpu_custom_call.1} parent=5 // pred_fallthru
        _
      %p381 = scmp.le.s32.totalorder 1, %s25
      %p382 = scmp.lt.s32.totalorder %s25, 9
      %p383 = pnand %p381, %p382
      %p384 = pneg %p383
      // Predicated region
      $region45: #{tpu_custom_call.1} parent=5 // pred_check
        _
      $region46: #{tpu_custom_call.1} parent=5 // pred_check_branch
        %386 = sbr.rel (%p383) target = $region48
      $region47: #{tpu_custom_call.1} parent=5 // pred_region
        %s387 = ssub.s32 %s25, 1
        %s388 = sand.u32 %s59, 1
        %s389 = scalar_lea.sflag [#allocation7], %s388
        %s390 = sand.u32 %s59, 1
        %s391 = smul.addr %s390, 128
        %s392 = scalar_lea.vmem [#allocation6], %s391
        // Predicated region
        $region49: #{tpu_custom_call.1} parent=47 // pred_check
          %p393 = pneg %p72
        $region50: #{tpu_custom_call.1} parent=47 // pred_check_branch
          %395 = sbr.rel (%p393) target = $region52
        $region51: #{tpu_custom_call.1} parent=47 // pred_region
          %396 = dma.done %s389, 2048
        $region52: #{tpu_custom_call.1} parent=47 // pred_fallthru
          _
        %s397 = sand.u32 %s30, 1
        %s398 = scalar_lea.sflag [#allocation10], %s397
        %s399 = sand.u32 %s106, 1
        %s400 = smul.addr %s399, 64
        %s401 = scalar_lea.vmem [#allocation9], %s400
        // Predicated region
        $region53: #{tpu_custom_call.1} parent=47 // pred_check
          %p402 = pneg %p119
        $region54: #{tpu_custom_call.1} parent=47 // pred_check_branch
          %404 = sbr.rel (%p402) target = $region56
        $region55: #{tpu_custom_call.1} parent=47 // pred_region
          %405 = dma.done %s398, 1024
        $region56: #{tpu_custom_call.1} parent=47 // pred_fallthru
          _
        %s406 = sand.u32 %s30, 1
        %s407 = scalar_lea.sflag [#allocation10], %s406
        %s408 = sand.u32 %s132, 1
        %s409 = smul.addr %s408, 64
        %s410 = scalar_lea.vmem [#allocation11], %s409
        // Predicated region
        $region57: #{tpu_custom_call.1} parent=47 // pred_check
          %p411 = pneg %p145
        $region58: #{tpu_custom_call.1} parent=47 // pred_check_branch
          %413 = sbr.rel (%p411) target = $region60
        $region59: #{tpu_custom_call.1} parent=47 // pred_region
          %414 = dma.done %s407, 1024
        $region60: #{tpu_custom_call.1} parent=47 // pred_fallthru
          _
        %s415 = sand.u32 %s30, 1
        %s416 = scalar_lea.sflag [#allocation13], %s415
        %s417 = sand.u32 %s158, 1
        %s418 = smul.addr %s417, 4
        %s419 = scalar_lea.vmem [#allocation12], %s418
        // Predicated region
        $region61: #{tpu_custom_call.1} parent=47 // pred_check
          %p420 = pneg %p171
        $region62: #{tpu_custom_call.1} parent=47 // pred_check_branch
          %422 = sbr.rel (%p420) target = $region64
        $region63: #{tpu_custom_call.1} parent=47 // pred_region
          %423 = dma.done %s416, 64
        $region64: #{tpu_custom_call.1} parent=47 // pred_fallthru
          _
        %s424 = sand.u32 %s30, 1
        %s425 = scalar_lea.sflag [#allocation13], %s424
        %s426 = sand.u32 %s210, 1
        %s427 = smul.addr %s426, 64
        %s428 = scalar_lea.vmem [#allocation14], %s427
        // Predicated region
        $region65: #{tpu_custom_call.1} parent=47 // pred_check
          %p429 = pneg %p223
        $region66: #{tpu_custom_call.1} parent=47 // pred_check_branch
          %431 = sbr.rel (%p429) target = $region68
        $region67: #{tpu_custom_call.1} parent=47 // pred_region
          %432 = dma.done %s425, 1024
        $region68: #{tpu_custom_call.1} parent=47 // pred_fallthru
          _
        %s433 = sand.u32 %s59, 1
        %s434 = scalar_lea.sflag [#allocation7], %s433
        %s435 = sand.u32 %s59, 1
        %s436 = smul.addr %s435, 128
        %s437 = scalar_lea.vmem [#allocation6], %s436
        %p438 = pneg %p72
        %p439 = pneg %p69
        %p440 = pneg %p93
        %p441 = pneg %p90
        %s442 = sand.u32 %s30, 1
        %s443 = scalar_lea.sflag [#allocation10], %s442
        %s444 = sand.u32 %s106, 1
        %s445 = smul.addr %s444, 64
        %s446 = scalar_lea.vmem [#allocation9], %s445
        %p447 = pneg %p119
        %p448 = pneg %p116
        %s449 = sand.u32 %s30, 1
        %s450 = scalar_lea.sflag [#allocation10], %s449
        %s451 = sand.u32 %s132, 1
        %s452 = smul.addr %s451, 64
        %s453 = scalar_lea.vmem [#allocation11], %s452
        %p454 = pneg %p145
        %p455 = pneg %p142
        %s456 = sand.u32 %s30, 1
        %s457 = scalar_lea.sflag [#allocation13], %s456
        %s458 = sand.u32 %s158, 1
        %s459 = smul.addr %s458, 4
        %s460 = scalar_lea.vmem [#allocation12], %s459
        %p461 = pneg %p171
        %p462 = pneg %p168
        %p463 = scmp.lt.s32.totalorder %s37, 1
        %s464 = scalar_select %p463, %s37, 1
        %s465 = scalar_lea.vmem %s5, %s464
        %p466 = pneg %p197
        %p467 = pneg %p194
        %s468 = sand.u32 %s30, 1
        %s469 = scalar_lea.sflag [#allocation13], %s468
        %s470 = sand.u32 %s210, 1
        %s471 = smul.addr %s470, 64
        %s472 = scalar_lea.vmem [#allocation14], %s471
        %p473 = pneg %p223
        %p474 = pneg %p220
        %p475 = pneg %p251
        %p476 = pneg %p248
        %s477 = sand.u32 %s238, 1
        %s478 = scalar_lea.sflag [#allocation8], %s477
        %s479 = sand.u32 %s238, 1
        %s480 = smul.addr %s479, 64
        %s481 = scalar_lea.vmem [#allocation15], %s480
        %s482 = smul.u32 16, %s36
        %p483 = scmp.lt.s32.totalorder %s37, 1
        %s484 = scalar_select %p483, %s37, 1
        %s485 = scalar_lea.vmem %s5, %s484
        %s486 = smul.u32 16, %s37
        %s487 = smul.u32 16, %s36
        %p489 = scmp.eq.s32.totalorder %s37, 0
        // Predicated region
        $region69: #{tpu_custom_call.1} parent=47 // pred_check
          %p490 = pneg %p489
        $region70: #{tpu_custom_call.1} parent=47 // pred_check_branch
          %492 = sbr.rel (%p490) target = $region72
        $region71: #{tpu_custom_call.1} parent=47 // pred_region
          %v493 = vld [vmem:[%s392] sm:$0xff]
          %v494 = vld [vmem:[%s392 + $0x8] sm:$0xff]
          %v495 = vld [vmem:[%s392 + $0x10] sm:$0xff]
          %v496 = vld [vmem:[%s392 + $0x18] sm:$0xff]
          %v497 = vld [vmem:[%s392 + $0x20] sm:$0xff]
          %v498 = vld [vmem:[%s392 + $0x28] sm:$0xff]
          %v499 = vld [vmem:[%s392 + $0x30] sm:$0xff]
          %v500 = vld [vmem:[%s392 + $0x38] sm:$0xff]
          %v501 = vld [vmem:[%s392 + $0x40] sm:$0xff]
          %v502 = vld [vmem:[%s392 + $0x48] sm:$0xff]
          %v503 = vld [vmem:[%s392 + $0x50] sm:$0xff]
          %v504 = vld [vmem:[%s392 + $0x58] sm:$0xff]
          %v505 = vld [vmem:[%s392 + $0x60] sm:$0xff]
          %v506 = vld [vmem:[%s392 + $0x68] sm:$0xff]
          %v507 = vld [vmem:[%s392 + $0x70] sm:$0xff]
          %v508 = vld [vmem:[%s392 + $0x78] sm:$0xff]
          %v509 = vmul.f32 %v493, %v493
          %v510 = vmul.f32 %v494, %v494
          %v511 = vmul.f32 %v495, %v495
          %v512 = vmul.f32 %v496, %v496
          %v513 = vmul.f32 %v497, %v497
          %v514 = vmul.f32 %v498, %v498
          %v515 = vmul.f32 %v499, %v499
          %v516 = vmul.f32 %v500, %v500
          %v517 = vmul.f32 %v501, %v501
          %v518 = vmul.f32 %v502, %v502
          %v519 = vmul.f32 %v503, %v503
          %v520 = vmul.f32 %v504, %v504
          %v521 = vmul.f32 %v505, %v505
          %v522 = vmul.f32 %v506, %v506
          %v523 = vmul.f32 %v507, %v507
          %v524 = vmul.f32 %v508, %v508
          %525 = vadd.xlane.f32.xlu0 %v509
          %v526 = vpop.xlane.xlu0 %525
          %527 = vadd.xlane.f32.xlu0 %v510
          %v528 = vpop.xlane.xlu0 %527
          %529 = vadd.xlane.f32.xlu0 %v511
          %v530 = vpop.xlane.xlu0 %529
          %531 = vadd.xlane.f32.xlu0 %v512
          %v532 = vpop.xlane.xlu0 %531
          %533 = vadd.xlane.f32.xlu0 %v513
          %v534 = vpop.xlane.xlu0 %533
          %535 = vadd.xlane.f32.xlu0 %v514
          %v536 = vpop.xlane.xlu0 %535
          %537 = vadd.xlane.f32.xlu0 %v515
          %v538 = vpop.xlane.xlu0 %537
          %539 = vadd.xlane.f32.xlu0 %v516
          %v540 = vpop.xlane.xlu0 %539
          %541 = vadd.xlane.f32.xlu0 %v517
          %v542 = vpop.xlane.xlu0 %541
          %543 = vadd.xlane.f32.xlu0 %v518
          %v544 = vpop.xlane.xlu0 %543
          %545 = vadd.xlane.f32.xlu0 %v519
          %v546 = vpop.xlane.xlu0 %545
          %547 = vadd.xlane.f32.xlu0 %v520
          %v548 = vpop.xlane.xlu0 %547
          %549 = vadd.xlane.f32.xlu0 %v521
          %v550 = vpop.xlane.xlu0 %549
          %551 = vadd.xlane.f32.xlu0 %v522
          %v552 = vpop.xlane.xlu0 %551
          %553 = vadd.xlane.f32.xlu0 %v523
          %v554 = vpop.xlane.xlu0 %553
          %555 = vadd.xlane.f32.xlu0 %v524
          %v556 = vpop.xlane.xlu0 %555
          %v557 = vrcp.pop 128.0
          %v558 = vmul.f32 %v526, %v557
          %v559 = vmul.f32 %v528, %v557
          %v560 = vmul.f32 %v530, %v557
          %v561 = vmul.f32 %v532, %v557
          %v562 = vmul.f32 %v534, %v557
          %v563 = vmul.f32 %v536, %v557
          %v564 = vmul.f32 %v538, %v557
          %v565 = vmul.f32 %v540, %v557
          %v566 = vmul.f32 %v542, %v557
          %v567 = vmul.f32 %v544, %v557
          %v568 = vmul.f32 %v546, %v557
          %v569 = vmul.f32 %v548, %v557
          %v570 = vmul.f32 %v550, %v557
          %v571 = vmul.f32 %v552, %v557
          %v572 = vmul.f32 %v554, %v557
          %v573 = vmul.f32 %v556, %v557
          %v574 = vadd.f32 %v558, 1e-05
          %v575 = vadd.f32 %v559, 1e-05
          %v576 = vadd.f32 %v560, 1e-05
          %v577 = vadd.f32 %v561, 1e-05
          %v578 = vadd.f32 %v562, 1e-05
          %v579 = vadd.f32 %v563, 1e-05
          %v580 = vadd.f32 %v564, 1e-05
          %v581 = vadd.f32 %v565, 1e-05
          %v582 = vadd.f32 %v566, 1e-05
          %v583 = vadd.f32 %v567, 1e-05
          %v584 = vadd.f32 %v568, 1e-05
          %v585 = vadd.f32 %v569, 1e-05
          %v586 = vadd.f32 %v570, 1e-05
          %v587 = vadd.f32 %v571, 1e-05
          %v588 = vadd.f32 %v572, 1e-05
          %v589 = vadd.f32 %v573, 1e-05
          %v590 = vrsqrt.pop %v574
          %v591 = vrsqrt.pop %v575
          %v592 = vrsqrt.pop %v576
          %v593 = vrsqrt.pop %v577
          %v594 = vrsqrt.pop %v578
          %v595 = vrsqrt.pop %v579
          %v596 = vrsqrt.pop %v580
          %v597 = vrsqrt.pop %v581
          %v598 = vrsqrt.pop %v582
          %v599 = vrsqrt.pop %v583
          %v600 = vrsqrt.pop %v584
          %v601 = vrsqrt.pop %v585
          %v602 = vrsqrt.pop %v586
          %v603 = vrsqrt.pop %v587
          %v604 = vrsqrt.pop %v588
          %v605 = vrsqrt.pop %v589
          %v606 = vmul.f32 %v493, %v590
          %v607 = vmul.f32 %v494, %v591
          %v608 = vmul.f32 %v495, %v592
          %v609 = vmul.f32 %v496, %v593
          %v610 = vmul.f32 %v497, %v594
          %v611 = vmul.f32 %v498, %v595
          %v612 = vmul.f32 %v499, %v596
          %v613 = vmul.f32 %v500, %v597
          %v614 = vmul.f32 %v501, %v598
          %v615 = vmul.f32 %v502, %v599
          %v616 = vmul.f32 %v503, %v600
          %v617 = vmul.f32 %v504, %v601
          %v618 = vmul.f32 %v505, %v602
          %v619 = vmul.f32 %v506, %v603
          %v620 = vmul.f32 %v507, %v604
          %v621 = vmul.f32 %v508, %v605
          %v622 = vld [vmem:[%s1] sm:$0x1]
          %v624 = vlaneseq
          %v625 = vshrl.u32 %v624, 7
          %v626 = vsub.s32 0, %v625
          %v627 = vrot.slane %v622, %v626
          %v629 = vmul.f32 %v606, %v627
          %v630 = vmul.f32 %v607, %v627
          %v631 = vmul.f32 %v608, %v627
          %v632 = vmul.f32 %v609, %v627
          %v633 = vmul.f32 %v610, %v627
          %v634 = vmul.f32 %v611, %v627
          %v635 = vmul.f32 %v612, %v627
          %v636 = vmul.f32 %v613, %v627
          %v637 = vmul.f32 %v614, %v627
          %v638 = vmul.f32 %v615, %v627
          %v639 = vmul.f32 %v616, %v627
          %v640 = vmul.f32 %v617, %v627
          %v641 = vmul.f32 %v618, %v627
          %v642 = vmul.f32 %v619, %v627
          %v643 = vmul.f32 %v620, %v627
          %v644 = vmul.f32 %v621, %v627
          %v645 = vpack.c.bf16 %v630, %v629
          %v646 = vpack.c.bf16 %v632, %v631
          %v647 = vpack.c.bf16 %v634, %v633
          %v648 = vpack.c.bf16 %v636, %v635
          %v649 = vpack.c.bf16 %v638, %v637
          %v650 = vpack.c.bf16 %v640, %v639
          %v651 = vpack.c.bf16 %v642, %v641
          %v652 = vpack.c.bf16 %v644, %v643
          %v661 = vunpack.c.l.b16 %v645
          %v662 = vunpack.c.h.b16 %v645
          %v663 = vunpack.c.l.b16 %v646
          %v664 = vunpack.c.h.b16 %v646
          %v665 = vunpack.c.l.b16 %v647
          %v666 = vunpack.c.h.b16 %v647
          %v667 = vunpack.c.l.b16 %v648
          %v668 = vunpack.c.h.b16 %v648
          %v669 = vunpack.c.l.b16 %v649
          %v670 = vunpack.c.h.b16 %v649
          %v671 = vunpack.c.l.b16 %v650
          %v672 = vunpack.c.h.b16 %v650
          %v673 = vunpack.c.l.b16 %v651
          %v674 = vunpack.c.h.b16 %v651
          %v675 = vunpack.c.l.b16 %v652
          %v676 = vunpack.c.h.b16 %v652
          %v677 = vpack.c.b16 %v661, %v661
          %v678 = vpack.c.b16 %v662, %v662
          %v679 = vpack.c.b16 %v663, %v663
          %v680 = vpack.c.b16 %v664, %v664
          %v681 = vpack.c.b16 %v665, %v665
          %v682 = vpack.c.b16 %v666, %v666
          %v683 = vpack.c.b16 %v667, %v667
          %v684 = vpack.c.b16 %v668, %v668
          %v685 = vpack.c.b16 %v669, %v669
          %v686 = vpack.c.b16 %v670, %v670
          %v687 = vpack.c.b16 %v671, %v671
          %v688 = vpack.c.b16 %v672, %v672
          %v689 = vpack.c.b16 %v673, %v673
          %v690 = vpack.c.b16 %v674, %v674
          %v691 = vpack.c.b16 %v675, %v675
          %v692 = vpack.c.b16 %v676, %v676
          %709 = vst [vmem:[#allocation2] sm:$0xf] %v677
          %710 = vst [vmem:[#allocation2 + $0x4] sm:$0xf] %v678
          %711 = vst [vmem:[#allocation2 + $0x8] sm:$0xf] %v679
          %712 = vst [vmem:[#allocation2 + $0xc] sm:$0xf] %v680
          %713 = vst [vmem:[#allocation2 + $0x10] sm:$0xf] %v681
          %714 = vst [vmem:[#allocation2 + $0x14] sm:$0xf] %v682
          %715 = vst [vmem:[#allocation2 + $0x18] sm:$0xf] %v683
          %716 = vst [vmem:[#allocation2 + $0x1c] sm:$0xf] %v684
          %717 = vst [vmem:[#allocation2 + $0x20] sm:$0xf] %v685
          %718 = vst [vmem:[#allocation2 + $0x24] sm:$0xf] %v686
          %719 = vst [vmem:[#allocation2 + $0x28] sm:$0xf] %v687
          %720 = vst [vmem:[#allocation2 + $0x2c] sm:$0xf] %v688
          %721 = vst [vmem:[#allocation2 + $0x30] sm:$0xf] %v689
          %722 = vst [vmem:[#allocation2 + $0x34] sm:$0xf] %v690
          %723 = vst [vmem:[#allocation2 + $0x38] sm:$0xf] %v691
          %724 = vst [vmem:[#allocation2 + $0x3c] sm:$0xf] %v692
        $region72: #{tpu_custom_call.1} parent=47 // pred_fallthru
          _
        %v725 = vld [vmem:[#allocation2] sm:$0xf]
        %v726 = vld [vmem:[#allocation2 + $0x4] sm:$0xf]
        %v727 = vld [vmem:[#allocation2 + $0x8] sm:$0xf]
        %v728 = vld [vmem:[#allocation2 + $0xc] sm:$0xf]
        %v729 = vld [vmem:[#allocation2 + $0x10] sm:$0xf]
        %v730 = vld [vmem:[#allocation2 + $0x14] sm:$0xf]
        %v731 = vld [vmem:[#allocation2 + $0x18] sm:$0xf]
        %v732 = vld [vmem:[#allocation2 + $0x1c] sm:$0xf]
        %v733 = vld [vmem:[#allocation2 + $0x20] sm:$0xf]
        %v734 = vld [vmem:[#allocation2 + $0x24] sm:$0xf]
        %v735 = vld [vmem:[#allocation2 + $0x28] sm:$0xf]
        %v736 = vld [vmem:[#allocation2 + $0x2c] sm:$0xf]
        %v737 = vld [vmem:[#allocation2 + $0x30] sm:$0xf]
        %v738 = vld [vmem:[#allocation2 + $0x34] sm:$0xf]
        %v739 = vld [vmem:[#allocation2 + $0x38] sm:$0xf]
        %v740 = vld [vmem:[#allocation2 + $0x3c] sm:$0xf]
        %v741 = vld [vmem:[%s401] sm:$0xf]
        %v742 = vld [vmem:[%s401 + $0x4] sm:$0xf]
        %v743 = vld [vmem:[%s401 + $0x8] sm:$0xf]
        %v744 = vld [vmem:[%s401 + $0xc] sm:$0xf]
        %v745 = vld [vmem:[%s401 + $0x10] sm:$0xf]
        %v746 = vld [vmem:[%s401 + $0x14] sm:$0xf]
        %v747 = vld [vmem:[%s401 + $0x18] sm:$0xf]
        %v748 = vld [vmem:[%s401 + $0x1c] sm:$0xf]
        %v749 = vld [vmem:[%s401 + $0x20] sm:$0xf]
        %v750 = vld [vmem:[%s401 + $0x24] sm:$0xf]
        %v751 = vld [vmem:[%s401 + $0x28] sm:$0xf]
        %v752 = vld [vmem:[%s401 + $0x2c] sm:$0xf]
        %v753 = vld [vmem:[%s401 + $0x30] sm:$0xf]
        %v754 = vld [vmem:[%s401 + $0x34] sm:$0xf]
        %v755 = vld [vmem:[%s401 + $0x38] sm:$0xf]
        %v756 = vld [vmem:[%s401 + $0x3c] sm:$0xf]
        %v773 = vunpack.c.l.b16 %v725
        %v774 = vunpack.c.l.b16 %v726
        %v775 = vunpack.c.l.b16 %v727
        %v776 = vunpack.c.l.b16 %v728
        %v777 = vunpack.c.l.b16 %v729
        %v778 = vunpack.c.l.b16 %v730
        %v779 = vunpack.c.l.b16 %v731
        %v780 = vunpack.c.l.b16 %v732
        %v781 = vunpack.c.l.b16 %v733
        %v782 = vunpack.c.l.b16 %v734
        %v783 = vunpack.c.l.b16 %v735
        %v784 = vunpack.c.l.b16 %v736
        %v785 = vunpack.c.l.b16 %v737
        %v786 = vunpack.c.l.b16 %v738
        %v787 = vunpack.c.l.b16 %v739
        %v788 = vunpack.c.l.b16 %v740
        %v789 = vpack.c.b16 %v774, %v773
        %v790 = vpack.c.b16 %v776, %v775
        %v791 = vpack.c.b16 %v778, %v777
        %v792 = vpack.c.b16 %v780, %v779
        %v793 = vpack.c.b16 %v782, %v781
        %v794 = vpack.c.b16 %v784, %v783
        %v795 = vpack.c.b16 %v786, %v785
        %v796 = vpack.c.b16 %v788, %v787
        %v821 = vunpack.c.l.b16 %v741
        %v822 = vunpack.c.l.b16 %v742
        %v823 = vunpack.c.l.b16 %v743
        %v824 = vunpack.c.l.b16 %v744
        %v825 = vunpack.c.l.b16 %v745
        %v826 = vunpack.c.l.b16 %v746
        %v827 = vunpack.c.l.b16 %v747
        %v828 = vunpack.c.l.b16 %v748
        %v829 = vunpack.c.l.b16 %v749
        %v830 = vunpack.c.l.b16 %v750
        %v831 = vunpack.c.l.b16 %v751
        %v832 = vunpack.c.l.b16 %v752
        %v833 = vunpack.c.l.b16 %v753
        %v834 = vunpack.c.l.b16 %v754
        %v835 = vunpack.c.l.b16 %v755
        %v836 = vunpack.c.l.b16 %v756
        %v837 = vpack.c.b16 %v822, %v821
        %v838 = vpack.c.b16 %v824, %v823
        %v839 = vpack.c.b16 %v826, %v825
        %v840 = vpack.c.b16 %v828, %v827
        %v841 = vpack.c.b16 %v830, %v829
        %v842 = vpack.c.b16 %v832, %v831
        %v843 = vpack.c.b16 %v834, %v833
        %v844 = vpack.c.b16 %v836, %v835
        %853 = vmatprep.subr.bf16.mxu0 0
        %854 = vmatpush1.bf16.msra.mxu0 %v844
        %855 = vmatprep.subr.bf16.mxu0 0
        %856 = vmatpush1.bf16.msra.mxu0 %v843
        %857 = vmatprep.subr.bf16.mxu0 0
        %858 = vmatpush1.bf16.msra.mxu0 %v842
        %859 = vmatprep.subr.bf16.mxu0 0
        %860 = vmatpush1.bf16.msra.mxu0 %v841
        %861 = vmatprep.subr.bf16.mxu0 0
        %862 = vmatpush1.bf16.msra.mxu0 %v840
        %863 = vmatprep.subr.bf16.mxu0 0
        %864 = vmatpush1.bf16.msra.mxu0 %v839
        %865 = vmatprep.subr.bf16.mxu0 0
        %866 = vmatpush1.bf16.msra.mxu0 %v838
        %867 = vmatprep.subr.bf16.mxu0 0
        %868 = vmatpush1.bf16.msra.mxu0 %v837
        %869 = vmatprep.subr.bf16.mxu0 0
        %870 = vmatpush2.bf16.msra.mxu0 0
        %871 = vmatprep.subr.bf16.mxu0 0
        %872 = vmatpush2.bf16.msra.mxu0 0
        %873 = vmatprep.subr.bf16.mxu0 0
        %874 = vmatpush2.bf16.msra.mxu0 0
        %875 = vmatprep.subr.bf16.mxu0 0
        %876 = vmatpush2.bf16.msra.mxu0 0
        %877 = vmatprep.subr.bf16.mxu0 0
        %878 = vmatpush2.bf16.msra.mxu0 0
        %879 = vmatprep.subr.bf16.mxu0 0
        %880 = vmatpush2.bf16.msra.mxu0 0
        %881 = vmatprep.subr.bf16.mxu0 0
        %882 = vmatpush2.bf16.msra.mxu0 0
        %883 = vmatprep.subr.bf16.mxu0 0
        %884 = vmatpush2.bf16.msra.mxu0 0
        %885 = vmatprep.mubr.bf16.mxu0 0
        %886 = vmatmul.mubr.bf16.gmra.mxu0 %v789
        %v887 = vpop.f32.mrf.mxu0
        %v888 = vadd.f32 0.0, %v887
        %v889 = vpop.f32.mrf.mxu0
        %v890 = vpop.f32.mrf.mxu0
        %v891 = vadd.f32 0.0, %v890
        %v892 = vpop.f32.mrf.mxu0
        %893 = vmatprep.mubr.bf16.mxu0 0
        %894 = vmatmul.mubr.bf16.gmra.mxu0 %v790
        %v895 = vpop.f32.mrf.mxu0
        %v896 = vadd.f32 0.0, %v895
        %v897 = vpop.f32.mrf.mxu0
        %v898 = vpop.f32.mrf.mxu0
        %v899 = vadd.f32 0.0, %v898
        %v900 = vpop.f32.mrf.mxu0
        %901 = vmatprep.mubr.bf16.mxu0 0
        %902 = vmatmul.mubr.bf16.gmra.mxu0 %v791
        %v903 = vpop.f32.mrf.mxu0
        %v904 = vadd.f32 0.0, %v903
        %v905 = vpop.f32.mrf.mxu0
        %v906 = vpop.f32.mrf.mxu0
        %v907 = vadd.f32 0.0, %v906
        %v908 = vpop.f32.mrf.mxu0
        %909 = vmatprep.mubr.bf16.mxu0 0
        %910 = vmatmul.mubr.bf16.gmra.mxu0 %v792
        %v911 = vpop.f32.mrf.mxu0
        %v912 = vadd.f32 0.0, %v911
        %v913 = vpop.f32.mrf.mxu0
        %v914 = vpop.f32.mrf.mxu0
        %v915 = vadd.f32 0.0, %v914
        %v916 = vpop.f32.mrf.mxu0
        %917 = vmatprep.mubr.bf16.mxu0 0
        %918 = vmatmul.mubr.bf16.gmra.mxu0 %v793
        %v919 = vpop.f32.mrf.mxu0
        %v920 = vadd.f32 0.0, %v919
        %v921 = vpop.f32.mrf.mxu0
        %v922 = vpop.f32.mrf.mxu0
        %v923 = vadd.f32 0.0, %v922
        %v924 = vpop.f32.mrf.mxu0
        %925 = vmatprep.mubr.bf16.mxu0 0
        %926 = vmatmul.mubr.bf16.gmra.mxu0 %v794
        %v927 = vpop.f32.mrf.mxu0
        %v928 = vadd.f32 0.0, %v927
        %v929 = vpop.f32.mrf.mxu0
        %v930 = vpop.f32.mrf.mxu0
        %v931 = vadd.f32 0.0, %v930
        %v932 = vpop.f32.mrf.mxu0
        %933 = vmatprep.mubr.bf16.mxu0 0
        %934 = vmatmul.mubr.bf16.gmra.mxu0 %v795
        %v935 = vpop.f32.mrf.mxu0
        %v936 = vadd.f32 0.0, %v935
        %v937 = vpop.f32.mrf.mxu0
        %v938 = vpop.f32.mrf.mxu0
        %v939 = vadd.f32 0.0, %v938
        %v940 = vpop.f32.mrf.mxu0
        %941 = vmatprep.mubr.bf16.mxu0 0
        %942 = vmatmul.mubr.bf16.gmra.mxu0 %v796
        %v943 = vpop.f32.mrf.mxu0
        %v944 = vadd.f32 0.0, %v943
        %v945 = vpop.f32.mrf.mxu0
        %v946 = vpop.f32.mrf.mxu0
        %v947 = vadd.f32 0.0, %v946
        %v948 = vpop.f32.mrf.mxu0
        %949 = vdwg.mxu0
        %v950 = vld [vmem:[%s410] sm:$0xf]
        %v951 = vld [vmem:[%s410 + $0x4] sm:$0xf]
        %v952 = vld [vmem:[%s410 + $0x8] sm:$0xf]
        %v953 = vld [vmem:[%s410 + $0xc] sm:$0xf]
        %v954 = vld [vmem:[%s410 + $0x10] sm:$0xf]
        %v955 = vld [vmem:[%s410 + $0x14] sm:$0xf]
        %v956 = vld [vmem:[%s410 + $0x18] sm:$0xf]
        %v957 = vld [vmem:[%s410 + $0x1c] sm:$0xf]
        %v958 = vld [vmem:[%s410 + $0x20] sm:$0xf]
        %v959 = vld [vmem:[%s410 + $0x24] sm:$0xf]
        %v960 = vld [vmem:[%s410 + $0x28] sm:$0xf]
        %v961 = vld [vmem:[%s410 + $0x2c] sm:$0xf]
        %v962 = vld [vmem:[%s410 + $0x30] sm:$0xf]
        %v963 = vld [vmem:[%s410 + $0x34] sm:$0xf]
        %v964 = vld [vmem:[%s410 + $0x38] sm:$0xf]
        %v965 = vld [vmem:[%s410 + $0x3c] sm:$0xf]
        %v982 = vunpack.c.l.b16 %v950
        %v983 = vunpack.c.l.b16 %v951
        %v984 = vunpack.c.l.b16 %v952
        %v985 = vunpack.c.l.b16 %v953
        %v986 = vunpack.c.l.b16 %v954
        %v987 = vunpack.c.l.b16 %v955
        %v988 = vunpack.c.l.b16 %v956
        %v989 = vunpack.c.l.b16 %v957
        %v990 = vunpack.c.l.b16 %v958
        %v991 = vunpack.c.l.b16 %v959
        %v992 = vunpack.c.l.b16 %v960
        %v993 = vunpack.c.l.b16 %v961
        %v994 = vunpack.c.l.b16 %v962
        %v995 = vunpack.c.l.b16 %v963
        %v996 = vunpack.c.l.b16 %v964
        %v997 = vunpack.c.l.b16 %v965
        %v998 = vpack.c.b16 %v983, %v982
        %v999 = vpack.c.b16 %v985, %v984
        %v1000 = vpack.c.b16 %v987, %v986
        %v1001 = vpack.c.b16 %v989, %v988
        %v1002 = vpack.c.b16 %v991, %v990
        %v1003 = vpack.c.b16 %v993, %v992
        %v1004 = vpack.c.b16 %v995, %v994
        %v1005 = vpack.c.b16 %v997, %v996
        %1014 = vmatprep.subr.bf16.mxu0 0
        %1015 = vmatpush1.bf16.msra.mxu0 %v1005
        %1016 = vmatprep.subr.bf16.mxu0 0
        %1017 = vmatpush1.bf16.msra.mxu0 %v1004
        %1018 = vmatprep.subr.bf16.mxu0 0
        %1019 = vmatpush1.bf16.msra.mxu0 %v1003
        %1020 = vmatprep.subr.bf16.mxu0 0
        %1021 = vmatpush1.bf16.msra.mxu0 %v1002
        %1022 = vmatprep.subr.bf16.mxu0 0
        %1023 = vmatpush1.bf16.msra.mxu0 %v1001
        %1024 = vmatprep.subr.bf16.mxu0 0
        %1025 = vmatpush1.bf16.msra.mxu0 %v1000
        %1026 = vmatprep.subr.bf16.mxu0 0
        %1027 = vmatpush1.bf16.msra.mxu0 %v999
        %1028 = vmatprep.subr.bf16.mxu0 0
        %1029 = vmatpush1.bf16.msra.mxu0 %v998
        %1030 = vmatprep.subr.bf16.mxu0 0
        %1031 = vmatpush2.bf16.msra.mxu0 0
        %1032 = vmatprep.subr.bf16.mxu0 0
        %1033 = vmatpush2.bf16.msra.mxu0 0
        %1034 = vmatprep.subr.bf16.mxu0 0
        %1035 = vmatpush2.bf16.msra.mxu0 0
        %1036 = vmatprep.subr.bf16.mxu0 0
        %1037 = vmatpush2.bf16.msra.mxu0 0
        %1038 = vmatprep.subr.bf16.mxu0 0
        %1039 = vmatpush2.bf16.msra.mxu0 0
        %1040 = vmatprep.subr.bf16.mxu0 0
        %1041 = vmatpush2.bf16.msra.mxu0 0
        %1042 = vmatprep.subr.bf16.mxu0 0
        %1043 = vmatpush2.bf16.msra.mxu0 0
        %1044 = vmatprep.subr.bf16.mxu0 0
        %1045 = vmatpush2.bf16.msra.mxu0 0
        %1046 = vmatprep.mubr.bf16.mxu0 0
        %1047 = vmatmul.mubr.bf16.gmra.mxu0 %v789
        %v1048 = vpop.f32.mrf.mxu0
        %v1049 = vadd.f32 0.0, %v1048
        %v1050 = vpop.f32.mrf.mxu0
        %v1051 = vpop.f32.mrf.mxu0
        %v1052 = vadd.f32 0.0, %v1051
        %v1053 = vpop.f32.mrf.mxu0
        %1054 = vmatprep.mubr.bf16.mxu0 0
        %1055 = vmatmul.mubr.bf16.gmra.mxu0 %v790
        %v1056 = vpop.f32.mrf.mxu0
        %v1057 = vadd.f32 0.0, %v1056
        %v1058 = vpop.f32.mrf.mxu0
        %v1059 = vpop.f32.mrf.mxu0
        %v1060 = vadd.f32 0.0, %v1059
        %v1061 = vpop.f32.mrf.mxu0
        %1062 = vmatprep.mubr.bf16.mxu0 0
        %1063 = vmatmul.mubr.bf16.gmra.mxu0 %v791
        %v1064 = vpop.f32.mrf.mxu0
        %v1065 = vadd.f32 0.0, %v1064
        %v1066 = vpop.f32.mrf.mxu0
        %v1067 = vpop.f32.mrf.mxu0
        %v1068 = vadd.f32 0.0, %v1067
        %v1069 = vpop.f32.mrf.mxu0
        %1070 = vmatprep.mubr.bf16.mxu0 0
        %1071 = vmatmul.mubr.bf16.gmra.mxu0 %v792
        %v1072 = vpop.f32.mrf.mxu0
        %v1073 = vadd.f32 0.0, %v1072
        %v1074 = vpop.f32.mrf.mxu0
        %v1075 = vpop.f32.mrf.mxu0
        %v1076 = vadd.f32 0.0, %v1075
        %v1077 = vpop.f32.mrf.mxu0
        %1078 = vmatprep.mubr.bf16.mxu0 0
        %1079 = vmatmul.mubr.bf16.gmra.mxu0 %v793
        %v1080 = vpop.f32.mrf.mxu0
        %v1081 = vadd.f32 0.0, %v1080
        %v1082 = vpop.f32.mrf.mxu0
        %v1083 = vpop.f32.mrf.mxu0
        %v1084 = vadd.f32 0.0, %v1083
        %v1085 = vpop.f32.mrf.mxu0
        %1086 = vmatprep.mubr.bf16.mxu0 0
        %1087 = vmatmul.mubr.bf16.gmra.mxu0 %v794
        %v1088 = vpop.f32.mrf.mxu0
        %v1089 = vadd.f32 0.0, %v1088
        %v1090 = vpop.f32.mrf.mxu0
        %v1091 = vpop.f32.mrf.mxu0
        %v1092 = vadd.f32 0.0, %v1091
        %v1093 = vpop.f32.mrf.mxu0
        %1094 = vmatprep.mubr.bf16.mxu0 0
        %1095 = vmatmul.mubr.bf16.gmra.mxu0 %v795
        %v1096 = vpop.f32.mrf.mxu0
        %v1097 = vadd.f32 0.0, %v1096
        %v1098 = vpop.f32.mrf.mxu0
        %v1099 = vpop.f32.mrf.mxu0
        %v1100 = vadd.f32 0.0, %v1099
        %v1101 = vpop.f32.mrf.mxu0
        %1102 = vmatprep.mubr.bf16.mxu0 0
        %1103 = vmatmul.mubr.bf16.gmra.mxu0 %v796
        %v1104 = vpop.f32.mrf.mxu0
        %v1105 = vadd.f32 0.0, %v1104
        %v1106 = vpop.f32.mrf.mxu0
        %v1107 = vpop.f32.mrf.mxu0
        %v1108 = vadd.f32 0.0, %v1107
        %v1109 = vpop.f32.mrf.mxu0
        %1110 = vdwg.mxu0
        %v1111 = vld [vmem:[%s419] sm:$0x7]
        %v1112 = vld [vmem:[%s485] sm:$0x1]
        %v1113 = vlaneseq
        %v1114 = vshrl.u32 %v1113, 7
        %v1115 = vsub.s32 2, %v1114
        %v1116 = vrot.slane %v1111, %v1115
        %v1117 = vmul.f32 %v1116, %v888
        %v1118 = vmul.f32 %v1116, %v891
        %v1119 = vmul.f32 %v1116, %v896
        %v1120 = vmul.f32 %v1116, %v899
        %v1121 = vmul.f32 %v1116, %v904
        %v1122 = vmul.f32 %v1116, %v907
        %v1123 = vmul.f32 %v1116, %v912
        %v1124 = vmul.f32 %v1116, %v915
        %v1125 = vmul.f32 %v1116, %v920
        %v1126 = vmul.f32 %v1116, %v923
        %v1127 = vmul.f32 %v1116, %v928
        %v1128 = vmul.f32 %v1116, %v931
        %v1129 = vmul.f32 %v1116, %v936
        %v1130 = vmul.f32 %v1116, %v939
        %v1131 = vmul.f32 %v1116, %v944
        %v1132 = vmul.f32 %v1116, %v947
        %v1134 = vlaneseq
        %v1135 = vshrl.u32 %v1134, 7
        %v1136 = vsub.s32 0, %v1135
        %v1137 = vrot.slane %v1112, %v1136
        %v1139 = vadd.f32 %v1137, %v1117
        %v1140 = vadd.f32 %v1137, %v1118
        %v1141 = vadd.f32 %v1137, %v1119
        %v1142 = vadd.f32 %v1137, %v1120
        %v1143 = vadd.f32 %v1137, %v1121
        %v1144 = vadd.f32 %v1137, %v1122
        %v1145 = vadd.f32 %v1137, %v1123
        %v1146 = vadd.f32 %v1137, %v1124
        %v1147 = vadd.f32 %v1137, %v1125
        %v1148 = vadd.f32 %v1137, %v1126
        %v1149 = vadd.f32 %v1137, %v1127
        %v1150 = vadd.f32 %v1137, %v1128
        %v1151 = vadd.f32 %v1137, %v1129
        %v1152 = vadd.f32 %v1137, %v1130
        %v1153 = vadd.f32 %v1137, %v1131
        %v1154 = vadd.f32 %v1137, %v1132
        %p1155 = scmp.eq.s32.totalorder %s36, 0
        // Predicated region
        $region73: #{tpu_custom_call.1} parent=47 // pred_check
          %p1156 = pneg %p1155
        $region74: #{tpu_custom_call.1} parent=47 // pred_check_branch
          %1158 = sbr.rel (%p1156) target = $region76
        $region75: #{tpu_custom_call.1} parent=47 // pred_region
          %1159 = vst [vmem:[#allocation4 + $0x6] sm:$0x3] 0.0
        $region76: #{tpu_custom_call.1} parent=47 // pred_fallthru
          _
        %p1160 = scmp.gt.s32.totalorder %s36, 0
        // Predicated region
        $region77: #{tpu_custom_call.1} parent=47 // pred_check
          %p1161 = pneg %p1160
        $region78: #{tpu_custom_call.1} parent=47 // pred_check_branch
          %1163 = sbr.rel (%p1161) target = $region80
        $region79: #{tpu_custom_call.1} parent=47 // pred_region
          %s1164 = smul.u32 %s37, 2
          %s1165 = scalar_lea.vmem [#allocation5], %s1164
          %v1166 = vld [vmem:[%s1165] sm:$0x3]
          %1167 = vst [vmem:[#allocation4 + $0x6] sm:$0x3] %v1166
        $region80: #{tpu_custom_call.1} parent=47 // pred_fallthru
          _
        %1168 = vst [vmem:[#allocation4 + $0x8] sm:$0xff] %v888
        %1169 = vst [vmem:[#allocation4 + $0x10] sm:$0xff] %v891
        %1170 = vst [vmem:[#allocation4 + $0x18] sm:$0xff] %v896
        %1171 = vst [vmem:[#allocation4 + $0x20] sm:$0xff] %v899
        %1172 = vst [vmem:[#allocation4 + $0x28] sm:$0xff] %v904
        %1173 = vst [vmem:[#allocation4 + $0x30] sm:$0xff] %v907
        %1174 = vst [vmem:[#allocation4 + $0x38] sm:$0xff] %v912
        %1175 = vst [vmem:[#allocation4 + $0x40] sm:$0xff] %v915
        %1176 = vst [vmem:[#allocation4 + $0x48] sm:$0xff] %v920
        %1177 = vst [vmem:[#allocation4 + $0x50] sm:$0xff] %v923
        %1178 = vst [vmem:[#allocation4 + $0x58] sm:$0xff] %v928
        %1179 = vst [vmem:[#allocation4 + $0x60] sm:$0xff] %v931
        %1180 = vst [vmem:[#allocation4 + $0x68] sm:$0xff] %v936
        %1181 = vst [vmem:[#allocation4 + $0x70] sm:$0xff] %v939
        %1182 = vst [vmem:[#allocation4 + $0x78] sm:$0xff] %v944
        %1183 = vst [vmem:[#allocation4 + $0x80] sm:$0xff] %v947
        %v1184 = vld [vmem:[#allocation4 + $0x6] sm:$0xff]
        %v1185 = vld [vmem:[#allocation4 + $0xe] sm:$0xff]
        %v1186 = vld [vmem:[#allocation4 + $0x16] sm:$0xff]
        %v1187 = vld [vmem:[#allocation4 + $0x1e] sm:$0xff]
        %v1188 = vld [vmem:[#allocation4 + $0x26] sm:$0xff]
        %v1189 = vld [vmem:[#allocation4 + $0x2e] sm:$0xff]
        %v1190 = vld [vmem:[#allocation4 + $0x36] sm:$0xff]
        %v1191 = vld [vmem:[#allocation4 + $0x3e] sm:$0xff]
        %v1192 = vld [vmem:[#allocation4 + $0x46] sm:$0xff]
        %v1193 = vld [vmem:[#allocation4 + $0x4e] sm:$0xff]
        %v1194 = vld [vmem:[#allocation4 + $0x56] sm:$0xff]
        %v1195 = vld [vmem:[#allocation4 + $0x5e] sm:$0xff]
        %v1196 = vld [vmem:[#allocation4 + $0x66] sm:$0xff]
        %v1197 = vld [vmem:[#allocation4 + $0x6e] sm:$0xff]
        %v1198 = vld [vmem:[#allocation4 + $0x76] sm:$0xff]
        %v1199 = vld [vmem:[#allocation4 + $0x7e] sm:$0xff]
        %v1200 = vlaneseq
        %v1201 = vshrl.u32 %v1200, 7
        %v1202 = vsub.s32 0, %v1201
        %v1203 = vrot.slane %v1111, %v1202
        %v1204 = vmul.f32 %v1203, %v1184
        %v1205 = vmul.f32 %v1203, %v1185
        %v1206 = vmul.f32 %v1203, %v1186
        %v1207 = vmul.f32 %v1203, %v1187
        %v1208 = vmul.f32 %v1203, %v1188
        %v1209 = vmul.f32 %v1203, %v1189
        %v1210 = vmul.f32 %v1203, %v1190
        %v1211 = vmul.f32 %v1203, %v1191
        %v1212 = vmul.f32 %v1203, %v1192
        %v1213 = vmul.f32 %v1203, %v1193
        %v1214 = vmul.f32 %v1203, %v1194
        %v1215 = vmul.f32 %v1203, %v1195
        %v1216 = vmul.f32 %v1203, %v1196
        %v1217 = vmul.f32 %v1203, %v1197
        %v1218 = vmul.f32 %v1203, %v1198
        %v1219 = vmul.f32 %v1203, %v1199
        %v1220 = vadd.f32 %v1139, %v1204
        %v1221 = vadd.f32 %v1140, %v1205
        %v1222 = vadd.f32 %v1141, %v1206
        %v1223 = vadd.f32 %v1142, %v1207
        %v1224 = vadd.f32 %v1143, %v1208
        %v1225 = vadd.f32 %v1144, %v1209
        %v1226 = vadd.f32 %v1145, %v1210
        %v1227 = vadd.f32 %v1146, %v1211
        %v1228 = vadd.f32 %v1147, %v1212
        %v1229 = vadd.f32 %v1148, %v1213
        %v1230 = vadd.f32 %v1149, %v1214
        %v1231 = vadd.f32 %v1150, %v1215
        %v1232 = vadd.f32 %v1151, %v1216
        %v1233 = vadd.f32 %v1152, %v1217
        %v1234 = vadd.f32 %v1153, %v1218
        %v1235 = vadd.f32 %v1154, %v1219
        %v1236 = vld [vmem:[#allocation4 + $0x7] sm:$0xff]
        %v1237 = vld [vmem:[#allocation4 + $0xf] sm:$0xff]
        %v1238 = vld [vmem:[#allocation4 + $0x17] sm:$0xff]
        %v1239 = vld [vmem:[#allocation4 + $0x1f] sm:$0xff]
        %v1240 = vld [vmem:[#allocation4 + $0x27] sm:$0xff]
        %v1241 = vld [vmem:[#allocation4 + $0x2f] sm:$0xff]
        %v1242 = vld [vmem:[#allocation4 + $0x37] sm:$0xff]
        %v1243 = vld [vmem:[#allocation4 + $0x3f] sm:$0xff]
        %v1244 = vld [vmem:[#allocation4 + $0x47] sm:$0xff]
        %v1245 = vld [vmem:[#allocation4 + $0x4f] sm:$0xff]
        %v1246 = vld [vmem:[#allocation4 + $0x57] sm:$0xff]
        %v1247 = vld [vmem:[#allocation4 + $0x5f] sm:$0xff]
        %v1248 = vld [vmem:[#allocation4 + $0x67] sm:$0xff]
        %v1249 = vld [vmem:[#allocation4 + $0x6f] sm:$0xff]
        %v1250 = vld [vmem:[#allocation4 + $0x77] sm:$0xff]
        %v1251 = vld [vmem:[#allocation4 + $0x7f] sm:$0xff]
        %v1252 = vlaneseq
        %v1253 = vshrl.u32 %v1252, 7
        %v1254 = vsub.s32 1, %v1253
        %v1255 = vrot.slane %v1111, %v1254
        %v1256 = vmul.f32 %v1255, %v1236
        %v1257 = vmul.f32 %v1255, %v1237
        %v1258 = vmul.f32 %v1255, %v1238
        %v1259 = vmul.f32 %v1255, %v1239
        %v1260 = vmul.f32 %v1255, %v1240
        %v1261 = vmul.f32 %v1255, %v1241
        %v1262 = vmul.f32 %v1255, %v1242
        %v1263 = vmul.f32 %v1255, %v1243
        %v1264 = vmul.f32 %v1255, %v1244
        %v1265 = vmul.f32 %v1255, %v1245
        %v1266 = vmul.f32 %v1255, %v1246
        %v1267 = vmul.f32 %v1255, %v1247
        %v1268 = vmul.f32 %v1255, %v1248
        %v1269 = vmul.f32 %v1255, %v1249
        %v1270 = vmul.f32 %v1255, %v1250
        %v1271 = vmul.f32 %v1255, %v1251
        %v1272 = vadd.f32 %v1220, %v1256
        %v1273 = vadd.f32 %v1221, %v1257
        %v1274 = vadd.f32 %v1222, %v1258
        %v1275 = vadd.f32 %v1223, %v1259
        %v1276 = vadd.f32 %v1224, %v1260
        %v1277 = vadd.f32 %v1225, %v1261
        %v1278 = vadd.f32 %v1226, %v1262
        %v1279 = vadd.f32 %v1227, %v1263
        %v1280 = vadd.f32 %v1228, %v1264
        %v1281 = vadd.f32 %v1229, %v1265
        %v1282 = vadd.f32 %v1230, %v1266
        %v1283 = vadd.f32 %v1231, %v1267
        %v1284 = vadd.f32 %v1232, %v1268
        %v1285 = vadd.f32 %v1233, %v1269
        %v1286 = vadd.f32 %v1234, %v1270
        %v1287 = vadd.f32 %v1235, %v1271
        %s1288 = smul.u32 %s37, 2
        %s1289 = scalar_lea.vmem [#allocation5], %s1288
        %1290 = vst [vmem:[%s1289 - $0x6] sm:$0xc0] %v947
        %v1291 = vxor.u32 %v1049, 2147483648
        %v1292 = vxor.u32 %v1052, 2147483648
        %v1293 = vxor.u32 %v1057, 2147483648
        %v1294 = vxor.u32 %v1060, 2147483648
        %v1295 = vxor.u32 %v1065, 2147483648
        %v1296 = vxor.u32 %v1068, 2147483648
        %v1297 = vxor.u32 %v1073, 2147483648
        %v1298 = vxor.u32 %v1076, 2147483648
        %v1299 = vxor.u32 %v1081, 2147483648
        %v1300 = vxor.u32 %v1084, 2147483648
        %v1301 = vxor.u32 %v1089, 2147483648
        %v1302 = vxor.u32 %v1092, 2147483648
        %v1303 = vxor.u32 %v1097, 2147483648
        %v1304 = vxor.u32 %v1100, 2147483648
        %v1305 = vxor.u32 %v1105, 2147483648
        %v1306 = vxor.u32 %v1108, 2147483648
        %v1307 = vmul.f32 %v1291, 1.442695
        %v1308 = vpow.pop %v1307
        %v1309 = vmul.f32 %v1292, 1.442695
        %v1310 = vpow.pop %v1309
        %v1311 = vmul.f32 %v1293, 1.442695
        %v1312 = vpow.pop %v1311
        %v1313 = vmul.f32 %v1294, 1.442695
        %v1314 = vpow.pop %v1313
        %v1315 = vmul.f32 %v1295, 1.442695
        %v1316 = vpow.pop %v1315
        %v1317 = vmul.f32 %v1296, 1.442695
        %v1318 = vpow.pop %v1317
        %v1319 = vmul.f32 %v1297, 1.442695
        %v1320 = vpow.pop %v1319
        %v1321 = vmul.f32 %v1298, 1.442695
        %v1322 = vpow.pop %v1321
        %v1323 = vmul.f32 %v1299, 1.442695
        %v1324 = vpow.pop %v1323
        %v1325 = vmul.f32 %v1300, 1.442695
        %v1326 = vpow.pop %v1325
        %v1327 = vmul.f32 %v1301, 1.442695
        %v1328 = vpow.pop %v1327
        %v1329 = vmul.f32 %v1302, 1.442695
        %v1330 = vpow.pop %v1329
        %v1331 = vmul.f32 %v1303, 1.442695
        %v1332 = vpow.pop %v1331
        %v1333 = vmul.f32 %v1304, 1.442695
        %v1334 = vpow.pop %v1333
        %v1335 = vmul.f32 %v1305, 1.442695
        %v1336 = vpow.pop %v1335
        %v1337 = vmul.f32 %v1306, 1.442695
        %v1338 = vpow.pop %v1337
        %v1339 = vadd.f32 %v1308, 1.0
        %v1340 = vadd.f32 %v1310, 1.0
        %v1341 = vadd.f32 %v1312, 1.0
        %v1342 = vadd.f32 %v1314, 1.0
        %v1343 = vadd.f32 %v1316, 1.0
        %v1344 = vadd.f32 %v1318, 1.0
        %v1345 = vadd.f32 %v1320, 1.0
        %v1346 = vadd.f32 %v1322, 1.0
        %v1347 = vadd.f32 %v1324, 1.0
        %v1348 = vadd.f32 %v1326, 1.0
        %v1349 = vadd.f32 %v1328, 1.0
        %v1350 = vadd.f32 %v1330, 1.0
        %v1351 = vadd.f32 %v1332, 1.0
        %v1352 = vadd.f32 %v1334, 1.0
        %v1353 = vadd.f32 %v1336, 1.0
        %v1354 = vadd.f32 %v1338, 1.0
        %v1355 = vrcp.pop %v1339
        %v1356 = vmul.f32 1.0, %v1355
        %v1357 = vrcp.pop %v1340
        %v1358 = vmul.f32 1.0, %v1357
        %v1359 = vrcp.pop %v1341
        %v1360 = vmul.f32 1.0, %v1359
        %v1361 = vrcp.pop %v1342
        %v1362 = vmul.f32 1.0, %v1361
        %v1363 = vrcp.pop %v1343
        %v1364 = vmul.f32 1.0, %v1363
        %v1365 = vrcp.pop %v1344
        %v1366 = vmul.f32 1.0, %v1365
        %v1367 = vrcp.pop %v1345
        %v1368 = vmul.f32 1.0, %v1367
        %v1369 = vrcp.pop %v1346
        %v1370 = vmul.f32 1.0, %v1369
        %v1371 = vrcp.pop %v1347
        %v1372 = vmul.f32 1.0, %v1371
        %v1373 = vrcp.pop %v1348
        %v1374 = vmul.f32 1.0, %v1373
        %v1375 = vrcp.pop %v1349
        %v1376 = vmul.f32 1.0, %v1375
        %v1377 = vrcp.pop %v1350
        %v1378 = vmul.f32 1.0, %v1377
        %v1379 = vrcp.pop %v1351
        %v1380 = vmul.f32 1.0, %v1379
        %v1381 = vrcp.pop %v1352
        %v1382 = vmul.f32 1.0, %v1381
        %v1383 = vrcp.pop %v1353
        %v1384 = vmul.f32 1.0, %v1383
        %v1385 = vrcp.pop %v1354
        %v1386 = vmul.f32 1.0, %v1385
        %v1387 = vmul.f32 %v1049, %v1356
        %v1388 = vmul.f32 %v1052, %v1358
        %v1389 = vmul.f32 %v1057, %v1360
        %v1390 = vmul.f32 %v1060, %v1362
        %v1391 = vmul.f32 %v1065, %v1364
        %v1392 = vmul.f32 %v1068, %v1366
        %v1393 = vmul.f32 %v1073, %v1368
        %v1394 = vmul.f32 %v1076, %v1370
        %v1395 = vmul.f32 %v1081, %v1372
        %v1396 = vmul.f32 %v1084, %v1374
        %v1397 = vmul.f32 %v1089, %v1376
        %v1398 = vmul.f32 %v1092, %v1378
        %v1399 = vmul.f32 %v1097, %v1380
        %v1400 = vmul.f32 %v1100, %v1382
        %v1401 = vmul.f32 %v1105, %v1384
        %v1402 = vmul.f32 %v1108, %v1386
        %v1403 = vmul.f32 %v1272, %v1387
        %v1404 = vmul.f32 %v1273, %v1388
        %v1405 = vmul.f32 %v1274, %v1389
        %v1406 = vmul.f32 %v1275, %v1390
        %v1407 = vmul.f32 %v1276, %v1391
        %v1408 = vmul.f32 %v1277, %v1392
        %v1409 = vmul.f32 %v1278, %v1393
        %v1410 = vmul.f32 %v1279, %v1394
        %v1411 = vmul.f32 %v1280, %v1395
        %v1412 = vmul.f32 %v1281, %v1396
        %v1413 = vmul.f32 %v1282, %v1397
        %v1414 = vmul.f32 %v1283, %v1398
        %v1415 = vmul.f32 %v1284, %v1399
        %v1416 = vmul.f32 %v1285, %v1400
        %v1417 = vmul.f32 %v1286, %v1401
        %v1418 = vmul.f32 %v1287, %v1402
        %v1419 = vpack.c.bf16 %v1404, %v1403
        %v1420 = vpack.c.bf16 %v1406, %v1405
        %v1421 = vpack.c.bf16 %v1408, %v1407
        %v1422 = vpack.c.bf16 %v1410, %v1409
        %v1423 = vpack.c.bf16 %v1412, %v1411
        %v1424 = vpack.c.bf16 %v1414, %v1413
        %v1425 = vpack.c.bf16 %v1416, %v1415
        %v1426 = vpack.c.bf16 %v1418, %v1417
        %v1427 = vld [vmem:[%s428] sm:$0xf]
        %v1428 = vld [vmem:[%s428 + $0x4] sm:$0xf]
        %v1429 = vld [vmem:[%s428 + $0x8] sm:$0xf]
        %v1430 = vld [vmem:[%s428 + $0xc] sm:$0xf]
        %v1431 = vld [vmem:[%s428 + $0x10] sm:$0xf]
        %v1432 = vld [vmem:[%s428 + $0x14] sm:$0xf]
        %v1433 = vld [vmem:[%s428 + $0x18] sm:$0xf]
        %v1434 = vld [vmem:[%s428 + $0x1c] sm:$0xf]
        %v1435 = vld [vmem:[%s428 + $0x20] sm:$0xf]
        %v1436 = vld [vmem:[%s428 + $0x24] sm:$0xf]
        %v1437 = vld [vmem:[%s428 + $0x28] sm:$0xf]
        %v1438 = vld [vmem:[%s428 + $0x2c] sm:$0xf]
        %v1439 = vld [vmem:[%s428 + $0x30] sm:$0xf]
        %v1440 = vld [vmem:[%s428 + $0x34] sm:$0xf]
        %v1441 = vld [vmem:[%s428 + $0x38] sm:$0xf]
        %v1442 = vld [vmem:[%s428 + $0x3c] sm:$0xf]
        %v1459 = vunpack.c.l.b16 %v1427
        %v1460 = vunpack.c.l.b16 %v1428
        %v1461 = vunpack.c.l.b16 %v1429
        %v1462 = vunpack.c.l.b16 %v1430
        %v1463 = vunpack.c.l.b16 %v1431
        %v1464 = vunpack.c.l.b16 %v1432
        %v1465 = vunpack.c.l.b16 %v1433
        %v1466 = vunpack.c.l.b16 %v1434
        %v1467 = vunpack.c.l.b16 %v1435
        %v1468 = vunpack.c.l.b16 %v1436
        %v1469 = vunpack.c.l.b16 %v1437
        %v1470 = vunpack.c.l.b16 %v1438
        %v1471 = vunpack.c.l.b16 %v1439
        %v1472 = vunpack.c.l.b16 %v1440
        %v1473 = vunpack.c.l.b16 %v1441
        %v1474 = vunpack.c.l.b16 %v1442
        %v1475 = vpack.c.b16 %v1460, %v1459
        %v1476 = vpack.c.b16 %v1462, %v1461
        %v1477 = vpack.c.b16 %v1464, %v1463
        %v1478 = vpack.c.b16 %v1466, %v1465
        %v1479 = vpack.c.b16 %v1468, %v1467
        %v1480 = vpack.c.b16 %v1470, %v1469
        %v1481 = vpack.c.b16 %v1472, %v1471
        %v1482 = vpack.c.b16 %v1474, %v1473
        %1491 = vmatprep.subr.bf16.mxu0 0
        %1492 = vmatpush1.bf16.msra.mxu0 %v1482
        %1493 = vmatprep.subr.bf16.mxu0 0
        %1494 = vmatpush1.bf16.msra.mxu0 %v1481
        %1495 = vmatprep.subr.bf16.mxu0 0
        %1496 = vmatpush1.bf16.msra.mxu0 %v1480
        %1497 = vmatprep.subr.bf16.mxu0 0
        %1498 = vmatpush1.bf16.msra.mxu0 %v1479
        %1499 = vmatprep.subr.bf16.mxu0 0
        %1500 = vmatpush1.bf16.msra.mxu0 %v1478
        %1501 = vmatprep.subr.bf16.mxu0 0
        %1502 = vmatpush1.bf16.msra.mxu0 %v1477
        %1503 = vmatprep.subr.bf16.mxu0 0
        %1504 = vmatpush1.bf16.msra.mxu0 %v1476
        %1505 = vmatprep.subr.bf16.mxu0 0
        %1506 = vmatpush1.bf16.msra.mxu0 %v1475
        %1507 = vmatprep.subr.bf16.mxu0 0
        %1508 = vmatpush2.bf16.msra.mxu0 0
        %1509 = vmatprep.subr.bf16.mxu0 0
        %1510 = vmatpush2.bf16.msra.mxu0 0
        %1511 = vmatprep.subr.bf16.mxu0 0
        %1512 = vmatpush2.bf16.msra.mxu0 0
        %1513 = vmatprep.subr.bf16.mxu0 0
        %1514 = vmatpush2.bf16.msra.mxu0 0
        %1515 = vmatprep.subr.bf16.mxu0 0
        %1516 = vmatpush2.bf16.msra.mxu0 0
        %1517 = vmatprep.subr.bf16.mxu0 0
        %1518 = vmatpush2.bf16.msra.mxu0 0
        %1519 = vmatprep.subr.bf16.mxu0 0
        %1520 = vmatpush2.bf16.msra.mxu0 0
        %1521 = vmatprep.subr.bf16.mxu0 0
        %1522 = vmatpush2.bf16.msra.mxu0 0
        %1523 = vmatprep.mubr.bf16.mxu0 0
        %1524 = vmatmul.mubr.bf16.gmra.mxu0 %v1419
        %v1525 = vpop.f32.mrf.mxu0
        %v1526 = vadd.f32 0.0, %v1525
        %v1527 = vpop.f32.mrf.mxu0
        %v1528 = vpop.f32.mrf.mxu0
        %v1529 = vadd.f32 0.0, %v1528
        %v1530 = vpop.f32.mrf.mxu0
        %1531 = vmatprep.mubr.bf16.mxu0 0
        %1532 = vmatmul.mubr.bf16.gmra.mxu0 %v1420
        %v1533 = vpop.f32.mrf.mxu0
        %v1534 = vadd.f32 0.0, %v1533
        %v1535 = vpop.f32.mrf.mxu0
        %v1536 = vpop.f32.mrf.mxu0
        %v1537 = vadd.f32 0.0, %v1536
        %v1538 = vpop.f32.mrf.mxu0
        %1539 = vmatprep.mubr.bf16.mxu0 0
        %1540 = vmatmul.mubr.bf16.gmra.mxu0 %v1421
        %v1541 = vpop.f32.mrf.mxu0
        %v1542 = vadd.f32 0.0, %v1541
        %v1543 = vpop.f32.mrf.mxu0
        %v1544 = vpop.f32.mrf.mxu0
        %v1545 = vadd.f32 0.0, %v1544
        %v1546 = vpop.f32.mrf.mxu0
        %1547 = vmatprep.mubr.bf16.mxu0 0
        %1548 = vmatmul.mubr.bf16.gmra.mxu0 %v1422
        %v1549 = vpop.f32.mrf.mxu0
        %v1550 = vadd.f32 0.0, %v1549
        %v1551 = vpop.f32.mrf.mxu0
        %v1552 = vpop.f32.mrf.mxu0
        %v1553 = vadd.f32 0.0, %v1552
        %v1554 = vpop.f32.mrf.mxu0
        %1555 = vmatprep.mubr.bf16.mxu0 0
        %1556 = vmatmul.mubr.bf16.gmra.mxu0 %v1423
        %v1557 = vpop.f32.mrf.mxu0
        %v1558 = vadd.f32 0.0, %v1557
        %v1559 = vpop.f32.mrf.mxu0
        %v1560 = vpop.f32.mrf.mxu0
        %v1561 = vadd.f32 0.0, %v1560
        %v1562 = vpop.f32.mrf.mxu0
        %1563 = vmatprep.mubr.bf16.mxu0 0
        %1564 = vmatmul.mubr.bf16.gmra.mxu0 %v1424
        %v1565 = vpop.f32.mrf.mxu0
        %v1566 = vadd.f32 0.0, %v1565
        %v1567 = vpop.f32.mrf.mxu0
        %v1568 = vpop.f32.mrf.mxu0
        %v1569 = vadd.f32 0.0, %v1568
        %v1570 = vpop.f32.mrf.mxu0
        %1571 = vmatprep.mubr.bf16.mxu0 0
        %1572 = vmatmul.mubr.bf16.gmra.mxu0 %v1425
        %v1573 = vpop.f32.mrf.mxu0
        %v1574 = vadd.f32 0.0, %v1573
        %v1575 = vpop.f32.mrf.mxu0
        %v1576 = vpop.f32.mrf.mxu0
        %v1577 = vadd.f32 0.0, %v1576
        %v1578 = vpop.f32.mrf.mxu0
        %1579 = vmatprep.mubr.bf16.mxu0 0
        %1580 = vmatmul.mubr.bf16.gmra.mxu0 %v1426
        %v1581 = vpop.f32.mrf.mxu0
        %v1582 = vadd.f32 0.0, %v1581
        %v1583 = vpop.f32.mrf.mxu0
        %v1584 = vpop.f32.mrf.mxu0
        %v1585 = vadd.f32 0.0, %v1584
        %v1586 = vpop.f32.mrf.mxu0
        %1587 = vdwg.mxu0
        // Predicated region
        $region81: #{tpu_custom_call.1} parent=47 // pred_check
          %p1588 = pneg %p489
        $region82: #{tpu_custom_call.1} parent=47 // pred_check_branch
          %1590 = sbr.rel (%p1588) target = $region84
        $region83: #{tpu_custom_call.1} parent=47 // pred_region
          %1591 = vst [vmem:[#allocation3] sm:$0xff] %v1526
          %1592 = vst [vmem:[#allocation3 + $0x8] sm:$0xff] %v1529
          %1593 = vst [vmem:[#allocation3 + $0x10] sm:$0xff] %v1534
          %1594 = vst [vmem:[#allocation3 + $0x18] sm:$0xff] %v1537
          %1595 = vst [vmem:[#allocation3 + $0x20] sm:$0xff] %v1542
          %1596 = vst [vmem:[#allocation3 + $0x28] sm:$0xff] %v1545
          %1597 = vst [vmem:[#allocation3 + $0x30] sm:$0xff] %v1550
          %1598 = vst [vmem:[#allocation3 + $0x38] sm:$0xff] %v1553
          %1599 = vst [vmem:[#allocation3 + $0x40] sm:$0xff] %v1558
          %1600 = vst [vmem:[#allocation3 + $0x48] sm:$0xff] %v1561
          %1601 = vst [vmem:[#allocation3 + $0x50] sm:$0xff] %v1566
          %1602 = vst [vmem:[#allocation3 + $0x58] sm:$0xff] %v1569
          %1603 = vst [vmem:[#allocation3 + $0x60] sm:$0xff] %v1574
          %1604 = vst [vmem:[#allocation3 + $0x68] sm:$0xff] %v1577
          %1605 = vst [vmem:[#allocation3 + $0x70] sm:$0xff] %v1582
          %1606 = vst [vmem:[#allocation3 + $0x78] sm:$0xff] %v1585
        $region84: #{tpu_custom_call.1} parent=47 // pred_fallthru
          _
        %p1607 = scmp.gt.s32.totalorder %s37, 0
        // Predicated region
        $region85: #{tpu_custom_call.1} parent=47 // pred_check
          %p1608 = pneg %p1607
        $region86: #{tpu_custom_call.1} parent=47 // pred_check_branch
          %1610 = sbr.rel (%p1608) target = $region88
        $region87: #{tpu_custom_call.1} parent=47 // pred_region
          %v1611 = vld [vmem:[#allocation3] sm:$0xff]
          %v1612 = vld [vmem:[#allocation3 + $0x8] sm:$0xff]
          %v1613 = vld [vmem:[#allocation3 + $0x10] sm:$0xff]
          %v1614 = vld [vmem:[#allocation3 + $0x18] sm:$0xff]
          %v1615 = vld [vmem:[#allocation3 + $0x20] sm:$0xff]
          %v1616 = vld [vmem:[#allocation3 + $0x28] sm:$0xff]
          %v1617 = vld [vmem:[#allocation3 + $0x30] sm:$0xff]
          %v1618 = vld [vmem:[#allocation3 + $0x38] sm:$0xff]
          %v1619 = vld [vmem:[#allocation3 + $0x40] sm:$0xff]
          %v1620 = vld [vmem:[#allocation3 + $0x48] sm:$0xff]
          %v1621 = vld [vmem:[#allocation3 + $0x50] sm:$0xff]
          %v1622 = vld [vmem:[#allocation3 + $0x58] sm:$0xff]
          %v1623 = vld [vmem:[#allocation3 + $0x60] sm:$0xff]
          %v1624 = vld [vmem:[#allocation3 + $0x68] sm:$0xff]
          %v1625 = vld [vmem:[#allocation3 + $0x70] sm:$0xff]
          %v1626 = vld [vmem:[#allocation3 + $0x78] sm:$0xff]
          %v1627 = vadd.f32 %v1611, %v1526
          %v1628 = vadd.f32 %v1612, %v1529
          %v1629 = vadd.f32 %v1613, %v1534
          %v1630 = vadd.f32 %v1614, %v1537
          %v1631 = vadd.f32 %v1615, %v1542
          %v1632 = vadd.f32 %v1616, %v1545
          %v1633 = vadd.f32 %v1617, %v1550
          %v1634 = vadd.f32 %v1618, %v1553
          %v1635 = vadd.f32 %v1619, %v1558
          %v1636 = vadd.f32 %v1620, %v1561
          %v1637 = vadd.f32 %v1621, %v1566
          %v1638 = vadd.f32 %v1622, %v1569
          %v1639 = vadd.f32 %v1623, %v1574
          %v1640 = vadd.f32 %v1624, %v1577
          %v1641 = vadd.f32 %v1625, %v1582
          %v1642 = vadd.f32 %v1626, %v1585
          %1643 = vst [vmem:[#allocation3] sm:$0xff] %v1627
          %1644 = vst [vmem:[#allocation3 + $0x8] sm:$0xff] %v1628
          %1645 = vst [vmem:[#allocation3 + $0x10] sm:$0xff] %v1629
          %1646 = vst [vmem:[#allocation3 + $0x18] sm:$0xff] %v1630
          %1647 = vst [vmem:[#allocation3 + $0x20] sm:$0xff] %v1631
          %1648 = vst [vmem:[#allocation3 + $0x28] sm:$0xff] %v1632
          %1649 = vst [vmem:[#allocation3 + $0x30] sm:$0xff] %v1633
          %1650 = vst [vmem:[#allocation3 + $0x38] sm:$0xff] %v1634
          %1651 = vst [vmem:[#allocation3 + $0x40] sm:$0xff] %v1635
          %1652 = vst [vmem:[#allocation3 + $0x48] sm:$0xff] %v1636
          %1653 = vst [vmem:[#allocation3 + $0x50] sm:$0xff] %v1637
          %1654 = vst [vmem:[#allocation3 + $0x58] sm:$0xff] %v1638
          %1655 = vst [vmem:[#allocation3 + $0x60] sm:$0xff] %v1639
          %1656 = vst [vmem:[#allocation3 + $0x68] sm:$0xff] %v1640
          %1657 = vst [vmem:[#allocation3 + $0x70] sm:$0xff] %v1641
          %1658 = vst [vmem:[#allocation3 + $0x78] sm:$0xff] %v1642
        $region88: #{tpu_custom_call.1} parent=47 // pred_fallthru
          _
        %p1659 = scmp.eq.s32.totalorder %s37, 1
        // Predicated region
        $region89: #{tpu_custom_call.1} parent=47 // pred_check
          %p1660 = pneg %p1659
        $region90: #{tpu_custom_call.1} parent=47 // pred_check_branch
          %1662 = sbr.rel (%p1660) target = $region92
        $region91: #{tpu_custom_call.1} parent=47 // pred_region
          %v1663 = vld [vmem:[#allocation3] sm:$0xff]
          %v1664 = vld [vmem:[#allocation3 + $0x8] sm:$0xff]
          %v1665 = vld [vmem:[#allocation3 + $0x10] sm:$0xff]
          %v1666 = vld [vmem:[#allocation3 + $0x18] sm:$0xff]
          %v1667 = vld [vmem:[#allocation3 + $0x20] sm:$0xff]
          %v1668 = vld [vmem:[#allocation3 + $0x28] sm:$0xff]
          %v1669 = vld [vmem:[#allocation3 + $0x30] sm:$0xff]
          %v1670 = vld [vmem:[#allocation3 + $0x38] sm:$0xff]
          %v1671 = vld [vmem:[#allocation3 + $0x40] sm:$0xff]
          %v1672 = vld [vmem:[#allocation3 + $0x48] sm:$0xff]
          %v1673 = vld [vmem:[#allocation3 + $0x50] sm:$0xff]
          %v1674 = vld [vmem:[#allocation3 + $0x58] sm:$0xff]
          %v1675 = vld [vmem:[#allocation3 + $0x60] sm:$0xff]
          %v1676 = vld [vmem:[#allocation3 + $0x68] sm:$0xff]
          %v1677 = vld [vmem:[#allocation3 + $0x70] sm:$0xff]
          %v1678 = vld [vmem:[#allocation3 + $0x78] sm:$0xff]
          %v1679 = vpack.c.bf16 %v1664, %v1663
          %v1680 = vpack.c.bf16 %v1666, %v1665
          %v1681 = vpack.c.bf16 %v1668, %v1667
          %v1682 = vpack.c.bf16 %v1670, %v1669
          %v1683 = vpack.c.bf16 %v1672, %v1671
          %v1684 = vpack.c.bf16 %v1674, %v1673
          %v1685 = vpack.c.bf16 %v1676, %v1675
          %v1686 = vpack.c.bf16 %v1678, %v1677
          %v1695 = vunpack.c.l.b16 %v1679
          %v1696 = vunpack.c.h.b16 %v1679
          %v1697 = vunpack.c.l.b16 %v1680
          %v1698 = vunpack.c.h.b16 %v1680
          %v1699 = vunpack.c.l.b16 %v1681
          %v1700 = vunpack.c.h.b16 %v1681
          %v1701 = vunpack.c.l.b16 %v1682
          %v1702 = vunpack.c.h.b16 %v1682
          %v1703 = vunpack.c.l.b16 %v1683
          %v1704 = vunpack.c.h.b16 %v1683
          %v1705 = vunpack.c.l.b16 %v1684
          %v1706 = vunpack.c.h.b16 %v1684
          %v1707 = vunpack.c.l.b16 %v1685
          %v1708 = vunpack.c.h.b16 %v1685
          %v1709 = vunpack.c.l.b16 %v1686
          %v1710 = vunpack.c.h.b16 %v1686
          %v1711 = vpack.c.b16 %v1695, %v1695
          %v1712 = vpack.c.b16 %v1696, %v1696
          %v1713 = vpack.c.b16 %v1697, %v1697
          %v1714 = vpack.c.b16 %v1698, %v1698
          %v1715 = vpack.c.b16 %v1699, %v1699
          %v1716 = vpack.c.b16 %v1700, %v1700
          %v1717 = vpack.c.b16 %v1701, %v1701
          %v1718 = vpack.c.b16 %v1702, %v1702
          %v1719 = vpack.c.b16 %v1703, %v1703
          %v1720 = vpack.c.b16 %v1704, %v1704
          %v1721 = vpack.c.b16 %v1705, %v1705
          %v1722 = vpack.c.b16 %v1706, %v1706
          %v1723 = vpack.c.b16 %v1707, %v1707
          %v1724 = vpack.c.b16 %v1708, %v1708
          %v1725 = vpack.c.b16 %v1709, %v1709
          %v1726 = vpack.c.b16 %v1710, %v1710
          %1743 = vst [vmem:[%s481] sm:$0xf] %v1711
          %1744 = vst [vmem:[%s481 + $0x4] sm:$0xf] %v1712
          %1745 = vst [vmem:[%s481 + $0x8] sm:$0xf] %v1713
          %1746 = vst [vmem:[%s481 + $0xc] sm:$0xf] %v1714
          %1747 = vst [vmem:[%s481 + $0x10] sm:$0xf] %v1715
          %1748 = vst [vmem:[%s481 + $0x14] sm:$0xf] %v1716
          %1749 = vst [vmem:[%s481 + $0x18] sm:$0xf] %v1717
          %1750 = vst [vmem:[%s481 + $0x1c] sm:$0xf] %v1718
          %1751 = vst [vmem:[%s481 + $0x20] sm:$0xf] %v1719
          %1752 = vst [vmem:[%s481 + $0x24] sm:$0xf] %v1720
          %1753 = vst [vmem:[%s481 + $0x28] sm:$0xf] %v1721
          %1754 = vst [vmem:[%s481 + $0x2c] sm:$0xf] %v1722
          %1755 = vst [vmem:[%s481 + $0x30] sm:$0xf] %v1723
          %1756 = vst [vmem:[%s481 + $0x34] sm:$0xf] %v1724
          %1757 = vst [vmem:[%s481 + $0x38] sm:$0xf] %v1725
          %1758 = vst [vmem:[%s481 + $0x3c] sm:$0xf] %v1726
        $region92: #{tpu_custom_call.1} parent=47 // pred_fallthru
          _
        %s1759 = sand.u32 %s238, 1
        %s1760 = scalar_lea.sflag [#allocation8], %s1759
        %s1761 = sand.u32 %s238, 1
        %s1762 = smul.addr %s1761, 64
        %s1763 = scalar_lea.vmem [#allocation15], %s1762
        // Predicated region
        $region93: #{tpu_custom_call.1} parent=47 // pred_check
          %p1764 = pneg %p248
        $region94: #{tpu_custom_call.1} parent=47 // pred_check_branch
          %1766 = sbr.rel (%p1764) target = $region96
        $region95: #{tpu_custom_call.1} parent=47 // pred_region
          %s1767 = smul.u32 16, %s36
          %s1769 = ssub.s32 1024, 1024
          %1770 = vsyncadd %s1760, %s1769
          %s1771 = smul.addr %s35, 32
          %s1772 = sadd.s32 %s1767, %s1771
          %s1773 = smul.addr %s1772, 64
          %s1774 = scalar_lea.hbm %s7, %s1773
          %s1775 = sshll.u32 %s1763, 4
          %s1776 = int_to_ptr.vmem [resolvable:$true] %s1775
          %1781 = dma.vmem_to_hbm [thread:$0]  %s1776, 1024, %s1774, %s1760, 64, 64, 4
        $region96: #{tpu_custom_call.1} parent=47 // pred_fallthru
          _
      $region48: #{tpu_custom_call.1} parent=5 // pred_fallthru
        _
      %p1782 = scmp.le.s32.totalorder 2, %s25
      // Predicated region
      $region97: #{tpu_custom_call.1} parent=5 // pred_check
        %p1783 = pneg %p1782
      $region98: #{tpu_custom_call.1} parent=5 // pred_check_branch
        %1785 = sbr.rel (%p1783) target = $region100
      $region99: #{tpu_custom_call.1} parent=5 // pred_region
        %s1786 = ssub.s32 %s25, 2
        // Predicated region
        $region101: #{tpu_custom_call.1} parent=99 // pred_check
          %p1787 = pneg %p254
        $region102: #{tpu_custom_call.1} parent=99 // pred_check_branch
          %1789 = sbr.rel (%p1787) target = $region104
        $region103: #{tpu_custom_call.1} parent=99 // pred_region
          %s1790 = sand.u32 %s239, 1
          %s1791 = scalar_lea.sflag [#allocation8], %s1790
          %s1792 = sand.u32 %s239, 1
          %s1793 = smul.addr %s1792, 64
          %s1794 = scalar_lea.vmem [#allocation15], %s1793
          %1795 = dma.done %s1791, 1024
        $region104: #{tpu_custom_call.1} parent=99 // pred_fallthru
          _
      $region100: #{tpu_custom_call.1} parent=5 // pred_fallthru
        _
    $region6: #{tpu_custom_call.1} parent=1 // loop_footer
      %s29 = sadd.s32 1, %s25
    $region7: #{tpu_custom_call.1} parent=1 // loop_footer_branch
      %24 = sbr.rel target = $region3
    $region8: #{tpu_custom_call.1} parent=1 // loop_exit
      _
    %1796 = vsyncpa [#allocation7], 1
    %s1797 = scalar_lea.sflag [#allocation7], 1
    %1798 = vsyncpa %s1797, 1
    %1799 = vsyncpa [#allocation10], 1
    %s1800 = scalar_lea.sflag [#allocation10], 1
    %1801 = vsyncpa %s1800, 1
    %1802 = vsyncpa [#allocation13], 1
    %s1803 = scalar_lea.sflag [#allocation13], 1
    %1804 = vsyncpa %s1803, 1
    %1805 = vsyncpa [#allocation8], 1
    %s1806 = scalar_lea.sflag [#allocation8], 1
    %1807 = vsyncpa %s1806, 1

</llo_original>
